<compile_context>
chip_gen: v7x
topology: tpu7x:2x2x1
jax: 0.10.0
libtpu: 0.0.40
codegen_flags: <defaults>
</compile_context>

<pallas_src>
import numpy as np
import jax
import jax.numpy as jnp
from jax.experimental import pallas as pl
from jax.experimental.pallas import tpu as pltpu

NUMBER_OF_QUBITS = 2            # -> D = 4 probabilities, so out[:, [0, 2]] is valid
NUMBER_OF_REPS = 2              # weights: 3 * n_qubits * n_reps parameters
DIM = 2 ** NUMBER_OF_QUBITS
OUT_COLS = (0, 2)               # forward() returns out[:, [0, 2]]
M_OUT = len(OUT_COLS)
TRI = DIM * (DIM + 1) // 2      # packed upper-triangular coefficients per column

BATCH = 512                     # demo batch (lane-dense after the transpose)
BLOCK_B = 256                   # lanes per grid step -> grid=(2,): both v7x TCs busy


# ----------------------------------------------------------------------------
# arcsin on [0, 1]: Abramowitz & Stegun 4.4.46 (mul/add/sqrt only; ~5e-7 in f32).
# ----------------------------------------------------------------------------
_ASIN_COEFFS = (-0.0012624911, 0.0066700901, -0.0170881256, 0.0308918810,
                -0.0501743046, 0.0889789874, -0.2145988016, 1.5707963050)


def _asin01(z):
    acc = _ASIN_COEFFS[0] * jnp.ones_like(z)
    for coef in _ASIN_COEFFS[1:]:
        acc = acc * z + coef
    return (np.pi / 2) - jnp.sqrt(1.0 - z) * acc


def _asin01_np(z):
    acc = np.full_like(z, _ASIN_COEFFS[0])
    for coef in _ASIN_COEFFS[1:]:
        acc = acc * z + coef
    return (np.pi / 2) - np.sqrt(1.0 - z) * acc


# ----------------------------------------------------------------------------
# Pallas kernels (batch on the lane axis everywhere)
# ----------------------------------------------------------------------------
def _quad_core(c, s, q_ref, o_ref):
    """c, s: lists of NQ rows, each (1, TB) f32 (cos(x/2), sin(x/2), batch on lanes).
    q_ref: (M*TRI,) f32 in SMEM (off-diagonal coefficients pre-doubled).
    Writes the fully post-processed generator output (M, TB) to o_ref."""
    nq = len(c)
    D = 1 << nq
    m = o_ref.shape[0]
    tri = D * (D + 1) // 2

    # Basis-state amplitudes of the real AngleEmbedding product state (wire 0 = MSB),
    # static unroll: for NQ=2 this is just c0*c1, c0*s1, s0*c1, s0*s1.
    psi = []
    for k in range(D):
        amp = None
        for q in range(nq):
            f = s[q] if ((k >> (nq - 1 - q)) & 1) else c[q]
            amp = f if amp is None else amp * f
        psi.append(amp)

    # Pairwise products (upper triangle i<=j), shared across the output columns.
    pair = [psi[i] * psi[j] for i in range(D) for j in range(i, D)]

    # probs_k = sum_t coeff[k*tri + t] * pair[t] : scalar*vector FMAs on the VPU.
    # No MXU (4x4 would waste the tile), no XLU reduction, no lane shuffles.
    cols = []
    for mm in range(m):
        off = mm * tri
        acc = q_ref[off] * pair[0]
        for t in range(1, tri):
            acc = acc + q_ref[off + t] * pair[t]
        cols.append(acc)
    probs = jnp.clip(jnp.concatenate(cols, axis=0), 0.0, 1.0)     # (M, TB)

    # Fused classical post-transform: 4/pi * arcsin(sqrt(p)) - 1/2.
    o_ref[...] = (4.0 / np.pi) * _asin01(jnp.sqrt(probs)) - 0.5


def _kernel_fused_trig(x_ref, q_ref, o_ref):
    # x_ref: (NQ, TB) raw angles; cos/sin computed in-kernel (idle EUP slot).
    nq = x_ref.shape[0]
    c, s = [], []
    for q in range(nq):
        xq = x_ref[q:q + 1, :].astype(jnp.float32)
        c.append(jnp.cos(0.5 * xq))
        s.append(jnp.sin(0.5 * xq))
    _quad_core(c, s, q_ref, o_ref)


def _kernel_host_trig(cs_ref, q_ref, o_ref):
    # cs_ref: (2*NQ, TB) = rows [cos(x/2) ; sin(x/2)] precomputed on the host.
    nq = cs_ref.shape[0] // 2
    c = [cs_ref[q:q + 1, :] for q in range(nq)]
    s = [cs_ref[nq + q:nq + q + 1, :] for q in range(nq)]
    _quad_core(c, s, q_ref, o_ref)


def _call(kernel, lead_t, q_coeffs, block_b):
    """lead_t: (F, B_pad) with batch on lanes; q_coeffs: (M*TRI,) scalars."""
    F, b_pad = lead_t.shape
    grid = (b_pad // block_b,)
    return pl.pallas_call(
        kernel,
        out_shape=jax.ShapeDtypeStruct((M_OUT, b_pad), jnp.float32),
        grid=grid,
        in_specs=[
            pl.BlockSpec((F, block_b), lambda i: (0, i)),          # batch-tiled, lane-dense
            pl.BlockSpec(memory_space=pltpu.MemorySpace.SMEM),     # 20 scalars in SMEM
        ],
        out_specs=pl.BlockSpec((M_OUT, block_b), lambda i: (0, i)),  # unmasked full-lane stores
        compiler_params=pltpu.CompilerParams(
            dimension_semantics=("parallel",)),                    # megacore / v7x sharding
        cost_estimate=pl.CostEstimate(
            flops=int(90 * b_pad),
            transcendentals=int((2 * NUMBER_OF_QUBITS + M_OUT) * b_pad),
            bytes_accessed=int(4 * (F + M_OUT) * b_pad)),
    )(lead_t, q_coeffs)


# ----------------------------------------------------------------------------
# One-time feature detection: can this Mosaic build lower in-kernel sin/cos?
# ----------------------------------------------------------------------------
_TRIG_IN_KERNEL = None


def _fused_trig_supported():
    global _TRIG_IN_KERNEL
    if _TRIG_IN_KERNEL is None:
        try:
            xt = jnp.zeros((NUMBER_OF_QUBITS, 128), jnp.float32)
            qz = jnp.zeros((M_OUT * TRI,), jnp.float32)
            jax.block_until_ready(_call(_kernel_fused_trig, xt, qz, 128))
            _TRIG_IN_KERNEL = True
        except Exception:
            # TODO(synk): narrow once Mosaic exposes a stable lowering-error type;
            # this probe runs exactly once per process, not per forward call.
            _TRIG_IN_KERNEL = False
    return _TRIG_IN_KERNEL


def _pick_block(batch):
    # Lane-dense tiles; prefer >= 2 grid steps so v7x can shard across both TCs.
    for cand in (2048, 1024, 512, 256, 128):
        if batch >= 2 * cand:
            return cand
    return 128


def generator_forward(x, q_coeffs, *, block_b=None):
    """Full Generator.forward (use_financial=False): (B, NQ) -> (B, 2)."""
    x = jnp.asarray(x, jnp.float32)
    B, nq = x.shape
    assert nq == NUMBER_OF_QUBITS
    q_coeffs = jnp.asarray(q_coeffs, jnp.float32).reshape(-1)

    if block_b is None:
        block_b = _pick_block(B)
    assert block_b % 128 == 0, "batch tile must be a multiple of 128 lanes"
    b_pad = ((B + block_b - 1) // block_b) * block_b      # pad any batch size

    xt = x.T                                               # (NQ, B): batch on lanes
    if b_pad != B:
        xt = jnp.pad(xt, ((0, 0), (0, b_pad - B)))

    if _fused_trig_supported():
        out_t = _call(_kernel_fused_trig, xt, q_coeffs, block_b)
    else:
        cs = jnp.concatenate([jnp.cos(0.5 * xt), jnp.sin(0.5 * xt)], axis=0)
        out_t = _call(_kernel_host_trig, cs, q_coeffs, block_b)

    return out_t[:, :B].T                                  # (B, 2), as the module returns


# ----------------------------------------------------------------------------
# Host-side construction of the fixed variational unitary (parameter "setup")
# ----------------------------------------------------------------------------
def _rz(t):
    return np.array([[np.exp(-0.5j * t), 0.0], [0.0, np.exp(0.5j * t)]], dtype=complex)


def _ry(t):
    c, s = np.cos(0.5 * t), np.sin(0.5 * t)
    return np.array([[c, -s], [s, c]], dtype=complex)


def _rot(phi, theta, omega):
    return _rz(omega) @ _ry(theta) @ _rz(phi)


def _embed_single(gate, wire, nq):
    mats = [np.eye(2, dtype=complex)] * nq
    mats[wire] = gate
    out = mats[0]
    for m in mats[1:]:
        out = np.kron(out, m)
    return out


def _cnot(control, target, nq):
    D = 2 ** nq
    U = np.zeros((D, D), dtype=complex)
    for b in range(D):
        bits = [(b >> (nq - 1 - w)) & 1 for w in range(nq)]
        if bits[control] == 1:
            bits[target] ^= 1
        b2 = sum(bit << (nq - 1 - w) for w, bit in enumerate(bits))
        U[b2, b] = 1.0
    return U


def build_variational_unitary(params, nq, reps):
    """StronglyEntanglingLayers-style circuit; params shape (reps, nq, 3)."""
    D = 2 ** nq
    U = np.eye(D, dtype=complex)
    for r in range(reps):
        for q in range(nq):
            phi, theta, omega = params[r, q]
            U = _embed_single(_rot(phi, theta, omega), q, nq) @ U
        if nq > 1:
            for q in range(nq):
                U = _cnot(q, (q + 1) % nq, nq) @ U
    return U


def build_output_coeffs(U, cols=OUT_COLS):
    """Packed symmetric quadratic forms: probs[:, k] = sum_{i<=j} coeff * psi_i psi_j,
    upper-triangle row-major order, off-diagonal entries pre-doubled."""
    D = U.shape[0]
    packed = []
    for k in cols:
        Q = np.real(np.outer(U[k], np.conj(U[k])))
        for i in range(D):
            for j in range(i, D):
                packed.append(Q[i, j] if i == j else 2.0 * Q[i, j])
    return np.asarray(packed, np.float32)                  # (len(cols) * TRI,)


# ----------------------------------------------------------------------------
# Pure-NumPy reference of the same forward pass (for validation)
# ----------------------------------------------------------------------------
def reference_forward(x, U, nq):
    x = np.asarray(x, np.float64)
    B = x.shape[0]
    D = 2 ** nq
    psi = np.ones((B, D))
    for q in range(nq):
        bits = (np.arange(D)[None, :] >> (nq - 1 - q)) & 1
        cq = np.cos(0.5 * x[:, q:q + 1])
        sq = np.sin(0.5 * x[:, q:q + 1])
        psi = psi * np.where(bits == 1, sq, cq)
    amp = psi @ U.T
    probs = np.abs(amp) ** 2
    out = (4.0 / np.pi) * np.arcsin(np.sqrt(np.clip(probs, 0.0, 1.0))) - 0.5
    return out[:, list(OUT_COLS)]


if __name__ == "__main__":
    key = jax.random.PRNGKey(0)
    kx, kp = jax.random.split(key)

    # Inputs as produced in fit_generator: 2*rand - 1 in [-1, 1)
    x = jax.random.uniform(kx, (BATCH, NUMBER_OF_QUBITS),
                           minval=-1.0, maxval=1.0, dtype=jnp.float32)

    # Deterministic circuit parameters: 3 * n_qubits * n_reps angles.
    # TODO(synk): weights are folded into fixed quadratic forms on the host, so this
    # kernel covers inference; gradients w.r.t. circuit params don't flow through it.
    params = np.asarray(
        jax.random.uniform(kp, (NUMBER_OF_REPS, NUMBER_OF_QUBITS, 3),
                           minval=0.0, maxval=2.0 * np.pi, dtype=jnp.float32),
        dtype=np.float64)

    U = build_variational_unitary(params, NUMBER_OF_QUBITS, NUMBER_OF_REPS)
    q_coeffs = build_output_coeffs(U)

    out = generator_forward(x, q_coeffs, block_b=BLOCK_B)
    out = jax.block_until_ready(out)

    # In-kernel arcsin polynomial sanity check over [0, 1] (incl. the z ~ 1 region).
    zz = np.linspace(0.0, 1.0, 4097)
    assert np.max(np.abs(_asin01_np(zz) - np.arcsin(zz))) < 5e-7

    ref = reference_forward(np.asarray(x), U, NUMBER_OF_QUBITS)
    assert out.shape == (BATCH, M_OUT), out.shape
    assert np.allclose(np.asarray(out), ref, atol=1e-2), (
        "mismatch vs reference:\n%s\n%s" % (np.asarray(out)[:4], ref[:4]))

    print("KERNEL_OK")
</pallas_src>

<mosaic_0001>
module attributes {stable_mosaic.version = 11 : i64} {
  func.func @_kernel_fused_trig(%arg0: i32, %arg1: memref<2x128xf32, #tpu.memory_space<vmem>>, %arg2: memref<20xf32, #tpu.memory_space<smem>>, %arg3: memref<2x128xf32, #tpu.memory_space<vmem>>) attributes {dimension_semantics = [#tpu.dimension_semantics<parallel>], iteration_bounds = array<i64: 1>, scalar_prefetch = 0 : i64, scratch_operands = 0 : i64, tpu.core_type = #tpu.core_type<tc>, window_params = [{transform_indices = @transform_0, window_bounds = array<i64: 2, 128>}, {transform_indices = @transform_1, window_bounds = array<i64: 20>}, {transform_indices = @transform_2, window_bounds = array<i64: 2, 128>}]} {
    %c0 = arith.constant 0 : index
    %c0_0 = arith.constant 0 : index
    %0 = vector.load %arg1[%c0, %c0_0] : memref<2x128xf32, #tpu.memory_space<vmem>>, vector<1x128xf32>
    %cst = arith.constant 5.000000e-01 : f32
    %1 = vector.broadcast %cst : f32 to vector<1x128xf32>
    %2 = arith.mulf %1, %0 : vector<1x128xf32>
    %3 = math.cos %2 : vector<1x128xf32>
    %cst_1 = arith.constant 5.000000e-01 : f32
    %4 = vector.broadcast %cst_1 : f32 to vector<1x128xf32>
    %5 = arith.mulf %4, %0 : vector<1x128xf32>
    %6 = math.sin %5 : vector<1x128xf32>
    %c1 = arith.constant 1 : index
    %c0_2 = arith.constant 0 : index
    %7 = vector.load %arg1[%c1, %c0_2] : memref<2x128xf32, #tpu.memory_space<vmem>>, vector<1x128xf32>
    %cst_3 = arith.constant 5.000000e-01 : f32
    %8 = vector.broadcast %cst_3 : f32 to vector<1x128xf32>
    %9 = arith.mulf %8, %7 : vector<1x128xf32>
    %10 = math.cos %9 : vector<1x128xf32>
    %cst_4 = arith.constant 5.000000e-01 : f32
    %11 = vector.broadcast %cst_4 : f32 to vector<1x128xf32>
    %12 = arith.mulf %11, %7 : vector<1x128xf32>
    %13 = math.sin %12 : vector<1x128xf32>
    %14 = arith.mulf %3, %10 : vector<1x128xf32>
    %15 = arith.mulf %3, %13 : vector<1x128xf32>
    %16 = arith.mulf %6, %10 : vector<1x128xf32>
    %17 = arith.mulf %6, %13 : vector<1x128xf32>
    %18 = arith.mulf %14, %14 : vector<1x128xf32>
    %19 = arith.mulf %14, %15 : vector<1x128xf32>
    %20 = arith.mulf %14, %16 : vector<1x128xf32>
    %21 = arith.mulf %14, %17 : vector<1x128xf32>
    %22 = arith.mulf %15, %15 : vector<1x128xf32>
    %23 = arith.mulf %15, %16 : vector<1x128xf32>
    %24 = arith.mulf %15, %17 : vector<1x128xf32>
    %25 = arith.mulf %16, %16 : vector<1x128xf32>
    %26 = arith.mulf %16, %17 : vector<1x128xf32>
    %27 = arith.mulf %17, %17 : vector<1x128xf32>
    %c0_5 = arith.constant 0 : index
    %28 = memref.load %arg2[%c0_5] : memref<20xf32, #tpu.memory_space<smem>>
    %29 = vector.broadcast %28 : f32 to vector<1x128xf32>
    %30 = arith.mulf %29, %18 : vector<1x128xf32>
    %c1_6 = arith.constant 1 : index
    %31 = memref.load %arg2[%c1_6] : memref<20xf32, #tpu.memory_space<smem>>
    %32 = vector.broadcast %31 : f32 to vector<1x128xf32>
    %33 = arith.mulf %32, %19 : vector<1x128xf32>
    %34 = arith.addf %30, %33 : vector<1x128xf32>
    %c2 = arith.constant 2 : index
    %35 = memref.load %arg2[%c2] : memref<20xf32, #tpu.memory_space<smem>>
    %36 = vector.broadcast %35 : f32 to vector<1x128xf32>
    %37 = arith.mulf %36, %20 : vector<1x128xf32>
    %38 = arith.addf %34, %37 : vector<1x128xf32>
    %c3 = arith.constant 3 : index
    %39 = memref.load %arg2[%c3] : memref<20xf32, #tpu.memory_space<smem>>
    %40 = vector.broadcast %39 : f32 to vector<1x128xf32>
    %41 = arith.mulf %40, %21 : vector<1x128xf32>
    %42 = arith.addf %38, %41 : vector<1x128xf32>
    %c4 = arith.constant 4 : index
    %43 = memref.load %arg2[%c4] : memref<20xf32, #tpu.memory_space<smem>>
    %44 = vector.broadcast %43 : f32 to vector<1x128xf32>
    %45 = arith.mulf %44, %22 : vector<1x128xf32>
    %46 = arith.addf %42, %45 : vector<1x128xf32>
    %c5 = arith.constant 5 : index
    %47 = memref.load %arg2[%c5] : memref<20xf32, #tpu.memory_space<smem>>
    %48 = vector.broadcast %47 : f32 to vector<1x128xf32>
    %49 = arith.mulf %48, %23 : vector<1x128xf32>
    %50 = arith.addf %46, %49 : vector<1x128xf32>
    %c6 = arith.constant 6 : index
    %51 = memref.load %arg2[%c6] : memref<20xf32, #tpu.memory_space<smem>>
    %52 = vector.broadcast %51 : f32 to vector<1x128xf32>
    %53 = arith.mulf %52, %24 : vector<1x128xf32>
    %54 = arith.addf %50, %53 : vector<1x128xf32>
    %c7 = arith.constant 7 : index
    %55 = memref.load %arg2[%c7] : memref<20xf32, #tpu.memory_space<smem>>
    %56 = vector.broadcast %55 : f32 to vector<1x128xf32>
    %57 = arith.mulf %56, %25 : vector<1x128xf32>
    %58 = arith.addf %54, %57 : vector<1x128xf32>
    %c8 = arith.constant 8 : index
    %59 = memref.load %arg2[%c8] : memref<20xf32, #tpu.memory_space<smem>>
    %60 = vector.broadcast %59 : f32 to vector<1x128xf32>
    %61 = arith.mulf %60, %26 : vector<1x128xf32>
    %62 = arith.addf %58, %61 : vector<1x128xf32>
    %c9 = arith.constant 9 : index
    %63 = memref.load %arg2[%c9] : memref<20xf32, #tpu.memory_space<smem>>
    %64 = vector.broadcast %63 : f32 to vector<1x128xf32>
    %65 = arith.mulf %64, %27 : vector<1x128xf32>
    %66 = arith.addf %62, %65 : vector<1x128xf32>
    %c10 = arith.constant 10 : index
    %67 = memref.load %arg2[%c10] : memref<20xf32, #tpu.memory_space<smem>>
    %68 = vector.broadcast %67 : f32 to vector<1x128xf32>
    %69 = arith.mulf %68, %18 : vector<1x128xf32>
    %c11 = arith.constant 11 : index
    %70 = memref.load %arg2[%c11] : memref<20xf32, #tpu.memory_space<smem>>
    %71 = vector.broadcast %70 : f32 to vector<1x128xf32>
    %72 = arith.mulf %71, %19 : vector<1x128xf32>
    %73 = arith.addf %69, %72 : vector<1x128xf32>
    %c12 = arith.constant 12 : index
    %74 = memref.load %arg2[%c12] : memref<20xf32, #tpu.memory_space<smem>>
    %75 = vector.broadcast %74 : f32 to vector<1x128xf32>
    %76 = arith.mulf %75, %20 : vector<1x128xf32>
    %77 = arith.addf %73, %76 : vector<1x128xf32>
    %c13 = arith.constant 13 : index
    %78 = memref.load %arg2[%c13] : memref<20xf32, #tpu.memory_space<smem>>
    %79 = vector.broadcast %78 : f32 to vector<1x128xf32>
    %80 = arith.mulf %79, %21 : vector<1x128xf32>
    %81 = arith.addf %77, %80 : vector<1x128xf32>
    %c14 = arith.constant 14 : index
    %82 = memref.load %arg2[%c14] : memref<20xf32, #tpu.memory_space<smem>>
    %83 = vector.broadcast %82 : f32 to vector<1x128xf32>
    %84 = arith.mulf %83, %22 : vector<1x128xf32>
    %85 = arith.addf %81, %84 : vector<1x128xf32>
    %c15 = arith.constant 15 : index
    %86 = memref.load %arg2[%c15] : memref<20xf32, #tpu.memory_space<smem>>
    %87 = vector.broadcast %86 : f32 to vector<1x128xf32>
    %88 = arith.mulf %87, %23 : vector<1x128xf32>
    %89 = arith.addf %85, %88 : vector<1x128xf32>
    %c16 = arith.constant 16 : index
    %90 = memref.load %arg2[%c16] : memref<20xf32, #tpu.memory_space<smem>>
    %91 = vector.broadcast %90 : f32 to vector<1x128xf32>
    %92 = arith.mulf %91, %24 : vector<1x128xf32>
    %93 = arith.addf %89, %92 : vector<1x128xf32>
    %c17 = arith.constant 17 : index
    %94 = memref.load %arg2[%c17] : memref<20xf32, #tpu.memory_space<smem>>
    %95 = vector.broadcast %94 : f32 to vector<1x128xf32>
    %96 = arith.mulf %95, %25 : vector<1x128xf32>
    %97 = arith.addf %93, %96 : vector<1x128xf32>
    %c18 = arith.constant 18 : index
    %98 = memref.load %arg2[%c18] : memref<20xf32, #tpu.memory_space<smem>>
    %99 = vector.broadcast %98 : f32 to vector<1x128xf32>
    %100 = arith.mulf %99, %26 : vector<1x128xf32>
    %101 = arith.addf %97, %100 : vector<1x128xf32>
    %c19 = arith.constant 19 : index
    %102 = memref.load %arg2[%c19] : memref<20xf32, #tpu.memory_space<smem>>
    %103 = vector.broadcast %102 : f32 to vector<1x128xf32>
    %104 = arith.mulf %103, %27 : vector<1x128xf32>
    %105 = arith.addf %101, %104 : vector<1x128xf32>
    %106 = tpu.concatenate %66, %105 in 0 : vector<1x128xf32>, vector<1x128xf32> -> vector<2x128xf32>
    %cst_7 = arith.constant 0.000000e+00 : f32
    %cst_8 = arith.constant 1.000000e+00 : f32
    %107 = vector.broadcast %cst_7 : f32 to vector<2x128xf32>
    %108 = arith.maximumf %107, %106 : vector<2x128xf32>
    %109 = vector.broadcast %cst_8 : f32 to vector<2x128xf32>
    %110 = arith.minimumf %109, %108 : vector<2x128xf32>
    %111 = math.sqrt %110 : vector<2x128xf32>
    %cst_9 = arith.constant 1.000000e+00 : f32
    %112 = vector.broadcast %cst_9 : f32 to vector<2x128xf32>
    %cst_10 = arith.constant -0.0012624911 : f32
    %113 = vector.broadcast %cst_10 : f32 to vector<2x128xf32>
    %114 = arith.mulf %113, %112 : vector<2x128xf32>
    %115 = arith.mulf %114, %111 : vector<2x128xf32>
    %cst_11 = arith.constant 6.670090e-03 : f32
    %116 = vector.broadcast %cst_11 : f32 to vector<2x128xf32>
    %117 = arith.addf %115, %116 : vector<2x128xf32>
    %118 = arith.mulf %117, %111 : vector<2x128xf32>
    %cst_12 = arith.constant -0.0170881264 : f32
    %119 = vector.broadcast %cst_12 : f32 to vector<2x128xf32>
    %120 = arith.addf %118, %119 : vector<2x128xf32>
    %121 = arith.mulf %120, %111 : vector<2x128xf32>
    %cst_13 = arith.constant 0.0308918804 : f32
    %122 = vector.broadcast %cst_13 : f32 to vector<2x128xf32>
    %123 = arith.addf %121, %122 : vector<2x128xf32>
    %124 = arith.mulf %123, %111 : vector<2x128xf32>
    %cst_14 = arith.constant -0.0501743034 : f32
    %125 = vector.broadcast %cst_14 : f32 to vector<2x128xf32>
    %126 = arith.addf %124, %125 : vector<2x128xf32>
    %127 = arith.mulf %126, %111 : vector<2x128xf32>
    %cst_15 = arith.constant 0.0889789909 : f32
    %128 = vector.broadcast %cst_15 : f32 to vector<2x128xf32>
    %129 = arith.addf %127, %128 : vector<2x128xf32>
    %130 = arith.mulf %129, %111 : vector<2x128xf32>
    %cst_16 = arith.constant -0.214598805 : f32
    %131 = vector.broadcast %cst_16 : f32 to vector<2x128xf32>
    %132 = arith.addf %130, %131 : vector<2x128xf32>
    %133 = arith.mulf %132, %111 : vector<2x128xf32>
    %cst_17 = arith.constant 1.57079625 : f32
    %134 = vector.broadcast %cst_17 : f32 to vector<2x128xf32>
    %135 = arith.addf %133, %134 : vector<2x128xf32>
    %cst_18 = arith.constant 1.000000e+00 : f32
    %136 = vector.broadcast %cst_18 : f32 to vector<2x128xf32>
    %137 = arith.subf %136, %111 : vector<2x128xf32>
    %138 = math.sqrt %137 : vector<2x128xf32>
    %139 = arith.mulf %138, %135 : vector<2x128xf32>
    %cst_19 = arith.constant 1.57079637 : f32
    %140 = vector.broadcast %cst_19 : f32 to vector<2x128xf32>
    %141 = arith.subf %140, %139 : vector<2x128xf32>
    %cst_20 = arith.constant 1.27323949 : f32
    %142 = vector.broadcast %cst_20 : f32 to vector<2x128xf32>
    %143 = arith.mulf %142, %141 : vector<2x128xf32>
    %cst_21 = arith.constant 5.000000e-01 : f32
    %144 = vector.broadcast %cst_21 : f32 to vector<2x128xf32>
    %145 = arith.subf %143, %144 : vector<2x128xf32>
    %c0_22 = arith.constant 0 : index
    %c0_23 = arith.constant 0 : index
    %146 = vector.load %arg3[%c0_22, %c0_23] : memref<2x128xf32, #tpu.memory_space<vmem>>, vector<2x128xf32>
    tpu.vector_store %arg3[%c0_22, %c0_23], %145 {strides = array<i32>} : memref<2x128xf32, #tpu.memory_space<vmem>>, vector<2x128xf32>,
    return
  }
  func.func @transform_0(%arg0: i32) -> (i32, i32) {
    %c0_i32 = arith.constant 0 : i32
    %c0_i32_0 = arith.constant 0 : i32
    return %c0_i32, %arg0 : i32, i32
  }
  func.func @transform_1(%arg0: i32) -> i32 {
    %c0_i32 = arith.constant 0 : i32
    %c0_i32_0 = arith.constant 0 : i32
    return %c0_i32 : i32
  }
  func.func @transform_2(%arg0: i32) -> (i32, i32) {
    %c0_i32 = arith.constant 0 : i32
    %c0_i32_0 = arith.constant 0 : i32
    return %c0_i32, %arg0 : i32, i32
  }
}

module attributes {stable_mosaic.version = 11 : i64} {
  func.func @_kernel_host_trig(%arg0: i32, %arg1: memref<4x256xf32, #tpu.memory_space<vmem>>, %arg2: memref<20xf32, #tpu.memory_space<smem>>, %arg3: memref<2x256xf32, #tpu.memory_space<vmem>>) attributes {dimension_semantics = [#tpu.dimension_semantics<parallel>], iteration_bounds = array<i64: 2>, scalar_prefetch = 0 : i64, scratch_operands = 0 : i64, tpu.core_type = #tpu.core_type<tc>, window_params = [{transform_indices = @transform_0, window_bounds = array<i64: 4, 256>}, {transform_indices = @transform_1, window_bounds = array<i64: 20>}, {transform_indices = @transform_2, window_bounds = array<i64: 2, 256>}]} {
    %c0 = arith.constant 0 : index
    %c0_0 = arith.constant 0 : index
    %0 = vector.load %arg1[%c0, %c0_0] : memref<4x256xf32, #tpu.memory_space<vmem>>, vector<1x256xf32>
    %c1 = arith.constant 1 : index
    %c0_1 = arith.constant 0 : index
    %1 = vector.load %arg1[%c1, %c0_1] : memref<4x256xf32, #tpu.memory_space<vmem>>, vector<1x256xf32>
    %c2 = arith.constant 2 : index
    %c0_2 = arith.constant 0 : index
    %2 = vector.load %arg1[%c2, %c0_2] : memref<4x256xf32, #tpu.memory_space<vmem>>, vector<1x256xf32>
    %c3 = arith.constant 3 : index
    %c0_3 = arith.constant 0 : index
    %3 = vector.load %arg1[%c3, %c0_3] : memref<4x256xf32, #tpu.memory_space<vmem>>, vector<1x256xf32>
    %4 = arith.mulf %0, %1 : vector<1x256xf32>
    %5 = arith.mulf %0, %3 : vector<1x256xf32>
    %6 = arith.mulf %2, %1 : vector<1x256xf32>
    %7 = arith.mulf %2, %3 : vector<1x256xf32>
    %8 = arith.mulf %4, %4 : vector<1x256xf32>
    %9 = arith.mulf %4, %5 : vector<1x256xf32>
    %10 = arith.mulf %4, %6 : vector<1x256xf32>
    %11 = arith.mulf %4, %7 : vector<1x256xf32>
    %12 = arith.mulf %5, %5 : vector<1x256xf32>
    %13 = arith.mulf %5, %6 : vector<1x256xf32>
    %14 = arith.mulf %5, %7 : vector<1x256xf32>
    %15 = arith.mulf %6, %6 : vector<1x256xf32>
    %16 = arith.mulf %6, %7 : vector<1x256xf32>
    %17 = arith.mulf %7, %7 : vector<1x256xf32>
    %c0_4 = arith.constant 0 : index
    %18 = memref.load %arg2[%c0_4] : memref<20xf32, #tpu.memory_space<smem>>
    %19 = vector.broadcast %18 : f32 to vector<1x256xf32>
    %20 = arith.mulf %19, %8 : vector<1x256xf32>
    %c1_5 = arith.constant 1 : index
    %21 = memref.load %arg2[%c1_5] : memref<20xf32, #tpu.memory_space<smem>>
    %22 = vector.broadcast %21 : f32 to vector<1x256xf32>
    %23 = arith.mulf %22, %9 : vector<1x256xf32>
    %24 = arith.addf %20, %23 : vector<1x256xf32>
    %c2_6 = arith.constant 2 : index
    %25 = memref.load %arg2[%c2_6] : memref<20xf32, #tpu.memory_space<smem>>
    %26 = vector.broadcast %25 : f32 to vector<1x256xf32>
    %27 = arith.mulf %26, %10 : vector<1x256xf32>
    %28 = arith.addf %24, %27 : vector<1x256xf32>
    %c3_7 = arith.constant 3 : index
    %29 = memref.load %arg2[%c3_7] : memref<20xf32, #tpu.memory_space<smem>>
    %30 = vector.broadcast %29 : f32 to vector<1x256xf32>
    %31 = arith.mulf %30, %11 : vector<1x256xf32>
    %32 = arith.addf %28, %31 : vector<1x256xf32>
    %c4 = arith.constant 4 : index
    %33 = memref.load %arg2[%c4] : memref<20xf32, #tpu.memory_space<smem>>
    %34 = vector.broadcast %33 : f32 to vector<1x256xf32>
    %35 = arith.mulf %34, %12 : vector<1x256xf32>
    %36 = arith.addf %32, %35 : vector<1x256xf32>
    %c5 = arith.constant 5 : index
    %37 = memref.load %arg2[%c5] : memref<20xf32, #tpu.memory_space<smem>>
    %38 = vector.broadcast %37 : f32 to vector<1x256xf32>
    %39 = arith.mulf %38, %13 : vector<1x256xf32>
    %40 = arith.addf %36, %39 : vector<1x256xf32>
    %c6 = arith.constant 6 : index
    %41 = memref.load %arg2[%c6] : memref<20xf32, #tpu.memory_space<smem>>
    %42 = vector.broadcast %41 : f32 to vector<1x256xf32>
    %43 = arith.mulf %42, %14 : vector<1x256xf32>
    %44 = arith.addf %40, %43 : vector<1x256xf32>
    %c7 = arith.constant 7 : index
    %45 = memref.load %arg2[%c7] : memref<20xf32, #tpu.memory_space<smem>>
    %46 = vector.broadcast %45 : f32 to vector<1x256xf32>
    %47 = arith.mulf %46, %15 : vector<1x256xf32>
    %48 = arith.addf %44, %47 : vector<1x256xf32>
    %c8 = arith.constant 8 : index
    %49 = memref.load %arg2[%c8] : memref<20xf32, #tpu.memory_space<smem>>
    %50 = vector.broadcast %49 : f32 to vector<1x256xf32>
    %51 = arith.mulf %50, %16 : vector<1x256xf32>
    %52 = arith.addf %48, %51 : vector<1x256xf32>
    %c9 = arith.constant 9 : index
    %53 = memref.load %arg2[%c9] : memref<20xf32, #tpu.memory_space<smem>>
    %54 = vector.broadcast %53 : f32 to vector<1x256xf32>
    %55 = arith.mulf %54, %17 : vector<1x256xf32>
    %56 = arith.addf %52, %55 : vector<1x256xf32>
    %c10 = arith.constant 10 : index
    %57 = memref.load %arg2[%c10] : memref<20xf32, #tpu.memory_space<smem>>
    %58 = vector.broadcast %57 : f32 to vector<1x256xf32>
    %59 = arith.mulf %58, %8 : vector<1x256xf32>
    %c11 = arith.constant 11 : index
    %60 = memref.load %arg2[%c11] : memref<20xf32, #tpu.memory_space<smem>>
    %61 = vector.broadcast %60 : f32 to vector<1x256xf32>
    %62 = arith.mulf %61, %9 : vector<1x256xf32>
    %63 = arith.addf %59, %62 : vector<1x256xf32>
    %c12 = arith.constant 12 : index
    %64 = memref.load %arg2[%c12] : memref<20xf32, #tpu.memory_space<smem>>
    %65 = vector.broadcast %64 : f32 to vector<1x256xf32>
    %66 = arith.mulf %65, %10 : vector<1x256xf32>
    %67 = arith.addf %63, %66 : vector<1x256xf32>
    %c13 = arith.constant 13 : index
    %68 = memref.load %arg2[%c13] : memref<20xf32, #tpu.memory_space<smem>>
    %69 = vector.broadcast %68 : f32 to vector<1x256xf32>
    %70 = arith.mulf %69, %11 : vector<1x256xf32>
    %71 = arith.addf %67, %70 : vector<1x256xf32>
    %c14 = arith.constant 14 : index
    %72 = memref.load %arg2[%c14] : memref<20xf32, #tpu.memory_space<smem>>
    %73 = vector.broadcast %72 : f32 to vector<1x256xf32>
    %74 = arith.mulf %73, %12 : vector<1x256xf32>
    %75 = arith.addf %71, %74 : vector<1x256xf32>
    %c15 = arith.constant 15 : index
    %76 = memref.load %arg2[%c15] : memref<20xf32, #tpu.memory_space<smem>>
    %77 = vector.broadcast %76 : f32 to vector<1x256xf32>
    %78 = arith.mulf %77, %13 : vector<1x256xf32>
    %79 = arith.addf %75, %78 : vector<1x256xf32>
    %c16 = arith.constant 16 : index
    %80 = memref.load %arg2[%c16] : memref<20xf32, #tpu.memory_space<smem>>
    %81 = vector.broadcast %80 : f32 to vector<1x256xf32>
    %82 = arith.mulf %81, %14 : vector<1x256xf32>
    %83 = arith.addf %79, %82 : vector<1x256xf32>
    %c17 = arith.constant 17 : index
    %84 = memref.load %arg2[%c17] : memref<20xf32, #tpu.memory_space<smem>>
    %85 = vector.broadcast %84 : f32 to vector<1x256xf32>
    %86 = arith.mulf %85, %15 : vector<1x256xf32>
    %87 = arith.addf %83, %86 : vector<1x256xf32>
    %c18 = arith.constant 18 : index
    %88 = memref.load %arg2[%c18] : memref<20xf32, #tpu.memory_space<smem>>
    %89 = vector.broadcast %88 : f32 to vector<1x256xf32>
    %90 = arith.mulf %89, %16 : vector<1x256xf32>
    %91 = arith.addf %87, %90 : vector<1x256xf32>
    %c19 = arith.constant 19 : index
    %92 = memref.load %arg2[%c19] : memref<20xf32, #tpu.memory_space<smem>>
    %93 = vector.broadcast %92 : f32 to vector<1x256xf32>
    %94 = arith.mulf %93, %17 : vector<1x256xf32>
    %95 = arith.addf %91, %94 : vector<1x256xf32>
    %96 = tpu.concatenate %56, %95 in 0 : vector<1x256xf32>, vector<1x256xf32> -> vector<2x256xf32>
    %cst = arith.constant 0.000000e+00 : f32
    %cst_8 = arith.constant 1.000000e+00 : f32
    %97 = vector.broadcast %cst : f32 to vector<2x256xf32>
    %98 = arith.maximumf %97, %96 : vector<2x256xf32>
    %99 = vector.broadcast %cst_8 : f32 to vector<2x256xf32>
    %100 = arith.minimumf %99, %98 : vector<2x256xf32>
    %101 = math.sqrt %100 : vector<2x256xf32>
    %cst_9 = arith.constant 1.000000e+00 : f32
    %102 = vector.broadcast %cst_9 : f32 to vector<2x256xf32>
    %cst_10 = arith.constant -0.0012624911 : f32
    %103 = vector.broadcast %cst_10 : f32 to vector<2x256xf32>
    %104 = arith.mulf %103, %102 : vector<2x256xf32>
    %105 = arith.mulf %104, %101 : vector<2x256xf32>
    %cst_11 = arith.constant 6.670090e-03 : f32
    %106 = vector.broadcast %cst_11 : f32 to vector<2x256xf32>
    %107 = arith.addf %105, %106 : vector<2x256xf32>
    %108 = arith.mulf %107, %101 : vector<2x256xf32>
    %cst_12 = arith.constant -0.0170881264 : f32
    %109 = vector.broadcast %cst_12 : f32 to vector<2x256xf32>
    %110 = arith.addf %108, %109 : vector<2x256xf32>
    %111 = arith.mulf %110, %101 : vector<2x256xf32>
    %cst_13 = arith.constant 0.0308918804 : f32
    %112 = vector.broadcast %cst_13 : f32 to vector<2x256xf32>
    %113 = arith.addf %111, %112 : vector<2x256xf32>
    %114 = arith.mulf %113, %101 : vector<2x256xf32>
    %cst_14 = arith.constant -0.0501743034 : f32
    %115 = vector.broadcast %cst_14 : f32 to vector<2x256xf32>
    %116 = arith.addf %114, %115 : vector<2x256xf32>
    %117 = arith.mulf %116, %101 : vector<2x256xf32>
    %cst_15 = arith.constant 0.0889789909 : f32
    %118 = vector.broadcast %cst_15 : f32 to vector<2x256xf32>
    %119 = arith.addf %117, %118 : vector<2x256xf32>
    %120 = arith.mulf %119, %101 : vector<2x256xf32>
    %cst_16 = arith.constant -0.214598805 : f32
    %121 = vector.broadcast %cst_16 : f32 to vector<2x256xf32>
    %122 = arith.addf %120, %121 : vector<2x256xf32>
    %123 = arith.mulf %122, %101 : vector<2x256xf32>
    %cst_17 = arith.constant 1.57079625 : f32
    %124 = vector.broadcast %cst_17 : f32 to vector<2x256xf32>
    %125 = arith.addf %123, %124 : vector<2x256xf32>
    %cst_18 = arith.constant 1.000000e+00 : f32
    %126 = vector.broadcast %cst_18 : f32 to vector<2x256xf32>
    %127 = arith.subf %126, %101 : vector<2x256xf32>
    %128 = math.sqrt %127 : vector<2x256xf32>
    %129 = arith.mulf %128, %125 : vector<2x256xf32>
    %cst_19 = arith.constant 1.57079637 : f32
    %130 = vector.broadcast %cst_19 : f32 to vector<2x256xf32>
    %131 = arith.subf %130, %129 : vector<2x256xf32>
    %cst_20 = arith.constant 1.27323949 : f32
    %132 = vector.broadcast %cst_20 : f32 to vector<2x256xf32>
    %133 = arith.mulf %132, %131 : vector<2x256xf32>
    %cst_21 = arith.constant 5.000000e-01 : f32
    %134 = vector.broadcast %cst_21 : f32 to vector<2x256xf32>
    %135 = arith.subf %133, %134 : vector<2x256xf32>
    %c0_22 = arith.constant 0 : index
    %c0_23 = arith.constant 0 : index
    %136 = vector.load %arg3[%c0_22, %c0_23] : memref<2x256xf32, #tpu.memory_space<vmem>>, vector<2x256xf32>
    tpu.vector_store %arg3[%c0_22, %c0_23], %135 {strides = array<i32>} : memref<2x256xf32, #tpu.memory_space<vmem>>, vector<2x256xf32>,
    return
  }
  func.func @transform_0(%arg0: i32) -> (i32, i32) {
    %c0_i32 = arith.constant 0 : i32
    %c0_i32_0 = arith.constant 0 : i32
    return %c0_i32, %arg0 : i32, i32
  }
  func.func @transform_1(%arg0: i32) -> i32 {
    %c0_i32 = arith.constant 0 : i32
    %c0_i32_0 = arith.constant 0 : i32
    return %c0_i32 : i32
  }
  func.func @transform_2(%arg0: i32) -> (i32, i32) {
    %c0_i32 = arith.constant 0 : i32
    %c0_i32_0 = arith.constant 0 : i32
    return %c0_i32, %arg0 : i32, i32
  }
}

</mosaic_0001>

<llo_original>
// kernel: tpu_custom_call.1
$region0: #{tpu_custom_call.1}
  #allocation0 [shape = 'u32[]', space=smem, size = 0x4, offset = 0x4, fixed_abs, tag = 'smem constant byte address 0x4 - core index']
  #allocation1 [shape = 'u32[144,128]{1,0:T(1,128)}', space=vmem, size = 0x12000, scoped, tag = 'internal scratch']
  %s0 = inlined_call_operand.hbm [shape: f32[2,128], index: 0, kind: input, shape index: {}]
  %s1 = inlined_call_operand.vmem [shape: f32[20], index: 1, kind: input, shape index: {}]
  %s2 = inlined_call_operand.hbm [shape: f32[2,128], index: 2, kind: output, shape index: {}]
  %s3 = sld [smem:[#allocation0]]
  $region26: #{tpu_custom_call.1} parent=0
    _
  %s5 = ssub.s32 1, %s3
  %s6 = scalar_select 0, %s5, %s3
  $region1: #{tpu_custom_call.1} parent=0
    #allocation2 [shape = 'u8[1024]{0}', space=vmem, size = 0x400, scoped, tag = 'input window, operand 0, single buffered']
    #allocation3 [shape = 's32[1]{0}', space=sflag, size = 0x4, scoped, tag = 'scoped memory for tpu_custom_call.1']
    #allocation4 [shape = 's32[1]{0}', space=sflag, size = 0x4, scoped, tag = 'scoped memory for tpu_custom_call.1']
    #allocation5 [shape = 's32[1]{0}', space=sflag, size = 0x4, scoped, tag = 'scoped memory for tpu_custom_call.1']
    #allocation6 [shape = 'u8[512]{0}', space=smem, size = 0x200, scoped, tag = 'input window, operand 1, single buffered']
    #allocation7 [shape = 'u8[1024]{0}', space=vmem, size = 0x400, scoped, tag = 'output window, operand 0, single buffered']
    %7 = vsyncpa [#allocation3], 0
    %8 = vsyncpa [#allocation5], 0
    %9 = vsyncpa [#allocation4], 0
    // Predicated region
    $region2: #{tpu_custom_call.1} parent=1 // pred_check
      _
    $region3: #{tpu_custom_call.1} parent=1 // pred_check_branch
      %11 = sbr.rel (0) target = $region5
    $region4: #{tpu_custom_call.1} parent=1 // pred_region
      %s13 = ssub.s32 32, 32
      %14 = vsyncadd [#allocation3], %s13
      %s16 = sshll.u32 [#allocation2], 4
      %s17 = int_to_ptr.vmem [resolvable:$true] %s16
      %19 = dma.hbm_to_vmem [thread:$0]  %s0, 32, %s17, [#allocation3]
    $region5: #{tpu_custom_call.1} parent=1 // pred_fallthru
      _
    // Predicated region
    $region6: #{tpu_custom_call.1} parent=1 // pred_check
      _
    $region7: #{tpu_custom_call.1} parent=1 // pred_check_branch
      %21 = sbr.rel (0) target = $region9
    $region8: #{tpu_custom_call.1} parent=1 // pred_region
      %s23 = ssub.s32 16, 16
      %24 = vsyncadd [#allocation5], %s23
      %s26 = sshll.u32 %s1, 4
      %s27 = int_to_ptr.vmem [resolvable:$true] %s26
      %29 = dma.vmem_to_smem %s27, 16, [#allocation6], [#allocation5]
    $region9: #{tpu_custom_call.1} parent=1 // pred_fallthru
      _
    // Predicated region
    $region10: #{tpu_custom_call.1} parent=1 // pred_check
      _
    $region11: #{tpu_custom_call.1} parent=1 // pred_check_branch
      %31 = sbr.rel (0) target = $region13
    $region12: #{tpu_custom_call.1} parent=1 // pred_region
      %32 = dma.done [#allocation3], 32
    $region13: #{tpu_custom_call.1} parent=1 // pred_fallthru
      _
    // Predicated region
    $region14: #{tpu_custom_call.1} parent=1 // pred_check
      _
    $region15: #{tpu_custom_call.1} parent=1 // pred_check_branch
      %34 = sbr.rel (0) target = $region17
    $region16: #{tpu_custom_call.1} parent=1 // pred_region
      %35 = dma.done [#allocation5], 16
    $region17: #{tpu_custom_call.1} parent=1 // pred_fallthru
      _
    %36 = sfence
    %v37 = vld [vmem:[#allocation2] sm:$0x1]
    %v38 = vmul.f32 %v37, 0.5
    %v39 = vand.u32 2147483647, %v38
    %vm40 = vcmp.le.f32.partialorder %v39, 0.7853982
    %vm41 = vcmp.lt.s32.totalorder %v38, 0
    %v42 = vand.u32 %v38, 2139095040
    %v43 = vshrl.u32 %v42, 23
    %v44 = vsub.s32 %v43, 127
    %v45 = vand.u32 2147483647, %v38
    %v46 = vand.u32 %v45, 8388607
    %v47 = vor.u32 %v46, 8388608
    %v48 = vsub.s32 0, %v47
    %v49 = vadd.s32 %v44, 1
    %vm50 = vcmp.gt.s32.totalorder %v49, 0
    %v51 = vsel %vm50, %v49, 0
    %v52 = vshrl.u32 %v51, 5
    %v53 = vand.u32 %v51, 31
    %v54 = vsub.s32 32, %v53
    %v55 = vshrl.u32 683565275, %v54
    %v56 = vshll.u32 683565275, %v53
    %v57 = vshrl.u32 2475754826, %v54
    %v58 = vor.u32 %v56, %v57
    %v59 = vshll.u32 2475754826, %v53
    %v60 = vshrl.u32 2131351028, %v54
    %v61 = vor.u32 %v59, %v60
    %v62 = vshll.u32 2131351028, %v53
    %v63 = vshrl.u32 2102212464, %v54
    %v64 = vor.u32 %v62, %v63
    %v65 = vshll.u32 2102212464, %v53
    %v66 = vshrl.u32 920167782, %v54
    %v67 = vor.u32 %v65, %v66
    %v68 = vshll.u32 920167782, %v53
    %v69 = vshrl.u32 1326507024, %v54
    %v70 = vor.u32 %v68, %v69
    %vm71 = vcmp.lt.s32.totalorder %v52, 1
    %vm72 = vcmp.lt.s32.totalorder %v52, 2
    %vm73 = vcmp.lt.s32.totalorder %v52, 3
    %vm74 = vcmp.lt.s32.totalorder %v52, 4
    %v75 = vsel %vm71, %v55, %v58
    %v76 = vsel %vm74, %v64, 2102212464
    %v77 = vsel %vm73, %v61, %v76
    %v78 = vsel %vm72, %v75, %v77
    %v79 = vsel %vm71, %v58, %v61
    %v80 = vsel %vm74, %v67, 920167782
    %v81 = vsel %vm73, %v64, %v80
    %v82 = vsel %vm72, %v79, %v81
    %v83 = vsel %vm71, %v61, %v64
    %v84 = vsel %vm74, %v70, 1326507024
    %v85 = vsel %vm73, %v67, %v84
    %v86 = vsel %vm72, %v83, %v85
    %v87 = vshll.u32 %v47, 8
    %v88 = vmul.u32.u64.compose %v87, %v86
    %v89 = vextract.low.u32 %v88
    %v90 = vextract.high.u32 %v88
    %v91 = vmul.u32.u64.compose %v87, %v82
    %v92 = vextract.low.u32 %v91
    %v93 = vextract.high.u32 %v91
    %v94 = vmul.u32 %v87, %v78
    %v95 = vadd.s32 %v90, %v92
    %vm96 = vc.u32 %v90, %v92
    %v97 = vadd.s32 %v93, 1
    %v98 = vsel %vm96, %v97, %v93
    %v99 = vadd.s32 %v94, %v98
    %v100 = vadd.s32 %v99, 536870912
    %v101 = vshrl.u32 %v100, 30
    %v102 = vshll.u32 %v101, 30
    %v103 = vsub.s32 %v99, %v102
    %vm104 = vcmp.lt.s32.totalorder %v103, 0
    %v105 = vsub.s32 0, %v103
    %v106 = vsel %vm104, %v105, %v103
    %v107 = vclz %v106
    %v108 = vsub.s32 %v107, 2
    %vm109 = vcmp.gt.s32.totalorder 0, %v108
    %v110 = vsel %vm109, 0, %v108
    %v111 = vsub.s32 32, %v110
    %v112 = vshll.u32 %v103, %v110
    %v113 = vshrl.u32 %v95, %v111
    %v114 = vor.u32 %v112, %v113
    %v115 = vsub.s32 4294967266, %v110
    %v116 = vadd.s32 %v115, 127
    %v117 = vshll.u32 %v116, 23
    %v118 = vor.u32 4788187, %v117
    %v119 = vand.u32 2147483647, %v118
    %v121 = vcvt.s32.f32 %v114
    %v122 = vmul.f32 %v121, %v119
    %v123 = vxor.u32 %v122, 2147483648
    %v124 = vsel %vm41, %v123, %v122
    %v125 = vsub.s32 4, %v101
    %v126 = vsel %vm41, %v125, %v101
    %v127 = vsel %vm40, %v38, %v124
    %v128 = vsel %vm40, 0, %v126
    %v129 = vcosq.f32.pop %v127
    %v130 = vsinq.f32.pop %v127
    %vm131 = vweird.f32 %v38
    %v132 = vand.u32 %v128, 3
    %vm133 = vcmp.lt.s32.totalorder %v132, 2
    %vm134 = vcmp.eq.s32.totalorder %v132, 0
    %v135 = vxor.u32 %v130, 2147483648
    %v136 = vsel %vm134, %v129, %v135
    %vm137 = vcmp.eq.s32.totalorder %v132, 2
    %v138 = vxor.u32 %v129, 2147483648
    %v139 = vsel %vm137, %v138, %v130
    %v140 = vsel %vm133, %v136, %v139
    %v141 = vsel %vm131, nan, %v140
    %v142 = vand.u32 2147483647, %v38
    %vm143 = vcmp.le.f32.partialorder %v142, 0.7853982
    %vm144 = vcmp.lt.s32.totalorder %v38, 0
    %v145 = vand.u32 %v38, 2139095040
    %v146 = vshrl.u32 %v145, 23
    %v147 = vsub.s32 %v146, 127
    %v148 = vand.u32 2147483647, %v38
    %v149 = vand.u32 %v148, 8388607
    %v150 = vor.u32 %v149, 8388608
    %v151 = vsub.s32 0, %v150
    %v152 = vadd.s32 %v147, 1
    %vm153 = vcmp.gt.s32.totalorder %v152, 0
    %v154 = vsel %vm153, %v152, 0
    %v155 = vshrl.u32 %v154, 5
    %v156 = vand.u32 %v154, 31
    %v157 = vsub.s32 32, %v156
    %v158 = vshrl.u32 683565275, %v157
    %v159 = vshll.u32 683565275, %v156
    %v160 = vshrl.u32 2475754826, %v157
    %v161 = vor.u32 %v159, %v160
    %v162 = vshll.u32 2475754826, %v156
    %v163 = vshrl.u32 2131351028, %v157
    %v164 = vor.u32 %v162, %v163
    %v165 = vshll.u32 2131351028, %v156
    %v166 = vshrl.u32 2102212464, %v157
    %v167 = vor.u32 %v165, %v166
    %v168 = vshll.u32 2102212464, %v156
    %v169 = vshrl.u32 920167782, %v157
    %v170 = vor.u32 %v168, %v169
    %v171 = vshll.u32 920167782, %v156
    %v172 = vshrl.u32 1326507024, %v157
    %v173 = vor.u32 %v171, %v172
    %vm174 = vcmp.lt.s32.totalorder %v155, 1
    %vm175 = vcmp.lt.s32.totalorder %v155, 2
    %vm176 = vcmp.lt.s32.totalorder %v155, 3
    %vm177 = vcmp.lt.s32.totalorder %v155, 4
    %v178 = vsel %vm174, %v158, %v161
    %v179 = vsel %vm177, %v167, 2102212464
    %v180 = vsel %vm176, %v164, %v179
    %v181 = vsel %vm175, %v178, %v180
    %v182 = vsel %vm174, %v161, %v164
    %v183 = vsel %vm177, %v170, 920167782
    %v184 = vsel %vm176, %v167, %v183
    %v185 = vsel %vm175, %v182, %v184
    %v186 = vsel %vm174, %v164, %v167
    %v187 = vsel %vm177, %v173, 1326507024
    %v188 = vsel %vm176, %v170, %v187
    %v189 = vsel %vm175, %v186, %v188
    %v190 = vshll.u32 %v150, 8
    %v191 = vmul.u32.u64.compose %v190, %v189
    %v192 = vextract.low.u32 %v191
    %v193 = vextract.high.u32 %v191
    %v194 = vmul.u32.u64.compose %v190, %v185
    %v195 = vextract.low.u32 %v194
    %v196 = vextract.high.u32 %v194
    %v197 = vmul.u32 %v190, %v181
    %v198 = vadd.s32 %v193, %v195
    %vm199 = vc.u32 %v193, %v195
    %v200 = vadd.s32 %v196, 1
    %v201 = vsel %vm199, %v200, %v196
    %v202 = vadd.s32 %v197, %v201
    %v203 = vadd.s32 %v202, 536870912
    %v204 = vshrl.u32 %v203, 30
    %v205 = vshll.u32 %v204, 30
    %v206 = vsub.s32 %v202, %v205
    %vm207 = vcmp.lt.s32.totalorder %v206, 0
    %v208 = vsub.s32 0, %v206
    %v209 = vsel %vm207, %v208, %v206
    %v210 = vclz %v209
    %v211 = vsub.s32 %v210, 2
    %vm212 = vcmp.gt.s32.totalorder 0, %v211
    %v213 = vsel %vm212, 0, %v211
    %v214 = vsub.s32 32, %v213
    %v215 = vshll.u32 %v206, %v213
    %v216 = vshrl.u32 %v198, %v214
    %v217 = vor.u32 %v215, %v216
    %v218 = vsub.s32 4294967266, %v213
    %v219 = vadd.s32 %v218, 127
    %v220 = vshll.u32 %v219, 23
    %v221 = vor.u32 4788187, %v220
    %v222 = vand.u32 2147483647, %v221
    %v224 = vcvt.s32.f32 %v217
    %v225 = vmul.f32 %v224, %v222
    %v226 = vxor.u32 %v225, 2147483648
    %v227 = vsel %vm144, %v226, %v225
    %v228 = vsub.s32 4, %v204
    %v229 = vsel %vm144, %v228, %v204
    %v230 = vsel %vm143, %v38, %v227
    %v231 = vsel %vm143, 0, %v229
    %v232 = vcosq.f32.pop %v230
    %v233 = vsinq.f32.pop %v230
    %vm234 = vweird.f32 %v38
    %v235 = vadd.s32 %v231, 3
    %v236 = vand.u32 %v235, 3
    %vm237 = vcmp.lt.s32.totalorder %v236, 2
    %vm238 = vcmp.eq.s32.totalorder %v236, 0
    %v239 = vxor.u32 %v233, 2147483648
    %v240 = vsel %vm238, %v232, %v239
    %vm241 = vcmp.eq.s32.totalorder %v236, 2
    %v242 = vxor.u32 %v232, 2147483648
    %v243 = vsel %vm241, %v242, %v233
    %v244 = vsel %vm237, %v240, %v243
    %v245 = vsel %vm234, nan, %v244
    %v246 = vld [vmem:[#allocation2 + $0x1] sm:$0x1]
    %v247 = vmul.f32 %v246, 0.5
    %v248 = vand.u32 2147483647, %v247
    %vm249 = vcmp.le.f32.partialorder %v248, 0.7853982
    %vm250 = vcmp.lt.s32.totalorder %v247, 0
    %v251 = vand.u32 %v247, 2139095040
    %v252 = vshrl.u32 %v251, 23
    %v253 = vsub.s32 %v252, 127
    %v254 = vand.u32 2147483647, %v247
    %v255 = vand.u32 %v254, 8388607
    %v256 = vor.u32 %v255, 8388608
    %v257 = vsub.s32 0, %v256
    %v258 = vadd.s32 %v253, 1
    %vm259 = vcmp.gt.s32.totalorder %v258, 0
    %v260 = vsel %vm259, %v258, 0
    %v261 = vshrl.u32 %v260, 5
    %v262 = vand.u32 %v260, 31
    %v263 = vsub.s32 32, %v262
    %v264 = vshrl.u32 683565275, %v263
    %v265 = vshll.u32 683565275, %v262
    %v266 = vshrl.u32 2475754826, %v263
    %v267 = vor.u32 %v265, %v266
    %v268 = vshll.u32 2475754826, %v262
    %v269 = vshrl.u32 2131351028, %v263
    %v270 = vor.u32 %v268, %v269
    %v271 = vshll.u32 2131351028, %v262
    %v272 = vshrl.u32 2102212464, %v263
    %v273 = vor.u32 %v271, %v272
    %v274 = vshll.u32 2102212464, %v262
    %v275 = vshrl.u32 920167782, %v263
    %v276 = vor.u32 %v274, %v275
    %v277 = vshll.u32 920167782, %v262
    %v278 = vshrl.u32 1326507024, %v263
    %v279 = vor.u32 %v277, %v278
    %vm280 = vcmp.lt.s32.totalorder %v261, 1
    %vm281 = vcmp.lt.s32.totalorder %v261, 2
    %vm282 = vcmp.lt.s32.totalorder %v261, 3
    %vm283 = vcmp.lt.s32.totalorder %v261, 4
    %v284 = vsel %vm280, %v264, %v267
    %v285 = vsel %vm283, %v273, 2102212464
    %v286 = vsel %vm282, %v270, %v285
    %v287 = vsel %vm281, %v284, %v286
    %v288 = vsel %vm280, %v267, %v270
    %v289 = vsel %vm283, %v276, 920167782
    %v290 = vsel %vm282, %v273, %v289
    %v291 = vsel %vm281, %v288, %v290
    %v292 = vsel %vm280, %v270, %v273
    %v293 = vsel %vm283, %v279, 1326507024
    %v294 = vsel %vm282, %v276, %v293
    %v295 = vsel %vm281, %v292, %v294
    %v296 = vshll.u32 %v256, 8
    %v297 = vmul.u32.u64.compose %v296, %v295
    %v298 = vextract.low.u32 %v297
    %v299 = vextract.high.u32 %v297
    %v300 = vmul.u32.u64.compose %v296, %v291
    %v301 = vextract.low.u32 %v300
    %v302 = vextract.high.u32 %v300
    %v303 = vmul.u32 %v296, %v287
    %v304 = vadd.s32 %v299, %v301
    %vm305 = vc.u32 %v299, %v301
    %v306 = vadd.s32 %v302, 1
    %v307 = vsel %vm305, %v306, %v302
    %v308 = vadd.s32 %v303, %v307
    %v309 = vadd.s32 %v308, 536870912
    %v310 = vshrl.u32 %v309, 30
    %v311 = vshll.u32 %v310, 30
    %v312 = vsub.s32 %v308, %v311
    %vm313 = vcmp.lt.s32.totalorder %v312, 0
    %v314 = vsub.s32 0, %v312
    %v315 = vsel %vm313, %v314, %v312
    %v316 = vclz %v315
    %v317 = vsub.s32 %v316, 2
    %vm318 = vcmp.gt.s32.totalorder 0, %v317
    %v319 = vsel %vm318, 0, %v317
    %v320 = vsub.s32 32, %v319
    %v321 = vshll.u32 %v312, %v319
    %v322 = vshrl.u32 %v304, %v320
    %v323 = vor.u32 %v321, %v322
    %v324 = vsub.s32 4294967266, %v319
    %v325 = vadd.s32 %v324, 127
    %v326 = vshll.u32 %v325, 23
    %v327 = vor.u32 4788187, %v326
    %v328 = vand.u32 2147483647, %v327
    %v330 = vcvt.s32.f32 %v323
    %v331 = vmul.f32 %v330, %v328
    %v332 = vxor.u32 %v331, 2147483648
    %v333 = vsel %vm250, %v332, %v331
    %v334 = vsub.s32 4, %v310
    %v335 = vsel %vm250, %v334, %v310
    %v336 = vsel %vm249, %v247, %v333
    %v337 = vsel %vm249, 0, %v335
    %v338 = vcosq.f32.pop %v336
    %v339 = vsinq.f32.pop %v336
    %vm340 = vweird.f32 %v247
    %v341 = vand.u32 %v337, 3
    %vm342 = vcmp.lt.s32.totalorder %v341, 2
    %vm343 = vcmp.eq.s32.totalorder %v341, 0
    %v344 = vxor.u32 %v339, 2147483648
    %v345 = vsel %vm343, %v338, %v344
    %vm346 = vcmp.eq.s32.totalorder %v341, 2
    %v347 = vxor.u32 %v338, 2147483648
    %v348 = vsel %vm346, %v347, %v339
    %v349 = vsel %vm342, %v345, %v348
    %v350 = vsel %vm340, nan, %v349
    %v351 = vand.u32 2147483647, %v247
    %vm352 = vcmp.le.f32.partialorder %v351, 0.7853982
    %vm353 = vcmp.lt.s32.totalorder %v247, 0
    %v354 = vand.u32 %v247, 2139095040
    %v355 = vshrl.u32 %v354, 23
    %v356 = vsub.s32 %v355, 127
    %v357 = vand.u32 2147483647, %v247
    %v358 = vand.u32 %v357, 8388607
    %v359 = vor.u32 %v358, 8388608
    %v360 = vsub.s32 0, %v359
    %v361 = vadd.s32 %v356, 1
    %vm362 = vcmp.gt.s32.totalorder %v361, 0
    %v363 = vsel %vm362, %v361, 0
    %v364 = vshrl.u32 %v363, 5
    %v365 = vand.u32 %v363, 31
    %v366 = vsub.s32 32, %v365
    %v367 = vshrl.u32 683565275, %v366
    %v368 = vshll.u32 683565275, %v365
    %v369 = vshrl.u32 2475754826, %v366
    %v370 = vor.u32 %v368, %v369
    %v371 = vshll.u32 2475754826, %v365
    %v372 = vshrl.u32 2131351028, %v366
    %v373 = vor.u32 %v371, %v372
    %v374 = vshll.u32 2131351028, %v365
    %v375 = vshrl.u32 2102212464, %v366
    %v376 = vor.u32 %v374, %v375
    %v377 = vshll.u32 2102212464, %v365
    %v378 = vshrl.u32 920167782, %v366
    %v379 = vor.u32 %v377, %v378
    %v380 = vshll.u32 920167782, %v365
    %v381 = vshrl.u32 1326507024, %v366
    %v382 = vor.u32 %v380, %v381
    %vm383 = vcmp.lt.s32.totalorder %v364, 1
    %vm384 = vcmp.lt.s32.totalorder %v364, 2
    %vm385 = vcmp.lt.s32.totalorder %v364, 3
    %vm386 = vcmp.lt.s32.totalorder %v364, 4
    %v387 = vsel %vm383, %v367, %v370
    %v388 = vsel %vm386, %v376, 2102212464
    %v389 = vsel %vm385, %v373, %v388
    %v390 = vsel %vm384, %v387, %v389
    %v391 = vsel %vm383, %v370, %v373
    %v392 = vsel %vm386, %v379, 920167782
    %v393 = vsel %vm385, %v376, %v392
    %v394 = vsel %vm384, %v391, %v393
    %v395 = vsel %vm383, %v373, %v376
    %v396 = vsel %vm386, %v382, 1326507024
    %v397 = vsel %vm385, %v379, %v396
    %v398 = vsel %vm384, %v395, %v397
    %v399 = vshll.u32 %v359, 8
    %v400 = vmul.u32.u64.compose %v399, %v398
    %v401 = vextract.low.u32 %v400
    %v402 = vextract.high.u32 %v400
    %v403 = vmul.u32.u64.compose %v399, %v394
    %v404 = vextract.low.u32 %v403
    %v405 = vextract.high.u32 %v403
    %v406 = vmul.u32 %v399, %v390
    %v407 = vadd.s32 %v402, %v404
    %vm408 = vc.u32 %v402, %v404
    %v409 = vadd.s32 %v405, 1
    %v410 = vsel %vm408, %v409, %v405
    %v411 = vadd.s32 %v406, %v410
    %v412 = vadd.s32 %v411, 536870912
    %v413 = vshrl.u32 %v412, 30
    %v414 = vshll.u32 %v413, 30
    %v415 = vsub.s32 %v411, %v414
    %vm416 = vcmp.lt.s32.totalorder %v415, 0
    %v417 = vsub.s32 0, %v415
    %v418 = vsel %vm416, %v417, %v415
    %v419 = vclz %v418
    %v420 = vsub.s32 %v419, 2
    %vm421 = vcmp.gt.s32.totalorder 0, %v420
    %v422 = vsel %vm421, 0, %v420
    %v423 = vsub.s32 32, %v422
    %v424 = vshll.u32 %v415, %v422
    %v425 = vshrl.u32 %v407, %v423
    %v426 = vor.u32 %v424, %v425
    %v427 = vsub.s32 4294967266, %v422
    %v428 = vadd.s32 %v427, 127
    %v429 = vshll.u32 %v428, 23
    %v430 = vor.u32 4788187, %v429
    %v431 = vand.u32 2147483647, %v430
    %v433 = vcvt.s32.f32 %v426
    %v434 = vmul.f32 %v433, %v431
    %v435 = vxor.u32 %v434, 2147483648
    %v436 = vsel %vm353, %v435, %v434
    %v437 = vsub.s32 4, %v413
    %v438 = vsel %vm353, %v437, %v413
    %v439 = vsel %vm352, %v247, %v436
    %v440 = vsel %vm352, 0, %v438
    %v441 = vcosq.f32.pop %v439
    %v442 = vsinq.f32.pop %v439
    %vm443 = vweird.f32 %v247
    %v444 = vadd.s32 %v440, 3
    %v445 = vand.u32 %v444, 3
    %vm446 = vcmp.lt.s32.totalorder %v445, 2
    %vm447 = vcmp.eq.s32.totalorder %v445, 0
    %v448 = vxor.u32 %v442, 2147483648
    %v449 = vsel %vm447, %v441, %v448
    %vm450 = vcmp.eq.s32.totalorder %v445, 2
    %v451 = vxor.u32 %v441, 2147483648
    %v452 = vsel %vm450, %v451, %v442
    %v453 = vsel %vm446, %v449, %v452
    %v454 = vsel %vm443, nan, %v453
    %v455 = vmul.f32 %v141, %v350
    %v456 = vmul.f32 %v141, %v454
    %v457 = vmul.f32 %v245, %v350
    %v458 = vmul.f32 %v245, %v454
    %v459 = vmul.f32 %v455, %v455
    %v460 = vmul.f32 %v455, %v456
    %v461 = vmul.f32 %v455, %v457
    %v462 = vmul.f32 %v455, %v458
    %v463 = vmul.f32 %v456, %v456
    %v464 = vmul.f32 %v456, %v457
    %v465 = vmul.f32 %v456, %v458
    %v466 = vmul.f32 %v457, %v457
    %v467 = vmul.f32 %v457, %v458
    %v468 = vmul.f32 %v458, %v458
    %s469 = sld [smem:[#allocation6]]
    %v470 = vstv %s469
    %v471 = vmul.f32 %v470, %v459
    %s472 = sld [smem:[#allocation6 + $0x1]]
    %v473 = vstv %s472
    %v474 = vmul.f32 %v473, %v460
    %v475 = vadd.f32 %v471, %v474
    %s476 = sld [smem:[#allocation6 + $0x2]]
    %v477 = vstv %s476
    %v478 = vmul.f32 %v477, %v461
    %v479 = vadd.f32 %v475, %v478
    %s480 = sld [smem:[#allocation6 + $0x3]]
    %v481 = vstv %s480
    %v482 = vmul.f32 %v481, %v462
    %v483 = vadd.f32 %v479, %v482
    %s484 = sld [smem:[#allocation6 + $0x4]]
    %v485 = vstv %s484
    %v486 = vmul.f32 %v485, %v463
    %v487 = vadd.f32 %v483, %v486
    %s488 = sld [smem:[#allocation6 + $0x5]]
    %v489 = vstv %s488
    %v490 = vmul.f32 %v489, %v464
    %v491 = vadd.f32 %v487, %v490
    %s492 = sld [smem:[#allocation6 + $0x6]]
    %v493 = vstv %s492
    %v494 = vmul.f32 %v493, %v465
    %v495 = vadd.f32 %v491, %v494
    %s496 = sld [smem:[#allocation6 + $0x7]]
    %v497 = vstv %s496
    %v498 = vmul.f32 %v497, %v466
    %v499 = vadd.f32 %v495, %v498
    %s500 = sld [smem:[#allocation6 + $0x8]]
    %v501 = vstv %s500
    %v502 = vmul.f32 %v501, %v467
    %v503 = vadd.f32 %v499, %v502
    %s504 = sld [smem:[#allocation6 + $0x9]]
    %v505 = vstv %s504
    %v506 = vmul.f32 %v505, %v468
    %v507 = vadd.f32 %v503, %v506
    %s508 = sld [smem:[#allocation6 + $0xa]]
    %v509 = vstv %s508
    %v510 = vmul.f32 %v509, %v459
    %s511 = sld [smem:[#allocation6 + $0xb]]
    %v512 = vstv %s511
    %v513 = vmul.f32 %v512, %v460
    %v514 = vadd.f32 %v510, %v513
    %s515 = sld [smem:[#allocation6 + $0xc]]
    %v516 = vstv %s515
    %v517 = vmul.f32 %v516, %v461
    %v518 = vadd.f32 %v514, %v517
    %s519 = sld [smem:[#allocation6 + $0xd]]
    %v520 = vstv %s519
    %v521 = vmul.f32 %v520, %v462
    %v522 = vadd.f32 %v518, %v521
    %s523 = sld [smem:[#allocation6 + $0xe]]
    %v524 = vstv %s523
    %v525 = vmul.f32 %v524, %v463
    %v526 = vadd.f32 %v522, %v525
    %s527 = sld [smem:[#allocation6 + $0xf]]
    %v528 = vstv %s527
    %v529 = vmul.f32 %v528, %v464
    %v530 = vadd.f32 %v526, %v529
    %s531 = sld [smem:[#allocation6 + $0x10]]
    %v532 = vstv %s531
    %v533 = vmul.f32 %v532, %v465
    %v534 = vadd.f32 %v530, %v533
    %s535 = sld [smem:[#allocation6 + $0x11]]
    %v536 = vstv %s535
    %v537 = vmul.f32 %v536, %v466
    %v538 = vadd.f32 %v534, %v537
    %s539 = sld [smem:[#allocation6 + $0x12]]
    %v540 = vstv %s539
    %v541 = vmul.f32 %v540, %v467
    %v542 = vadd.f32 %v538, %v541
    %s543 = sld [smem:[#allocation6 + $0x13]]
    %v544 = vstv %s543
    %v545 = vmul.f32 %v544, %v468
    %v546 = vadd.f32 %v542, %v545
    %v548 = vrot.slane %v546, 7
    %vm550 = vcmask 1040384
    %v551 = vsel %vm550, %v507, %v548
    %v552 = vmax.f32 %v551, 0.0
    %v553 = vmin.f32 %v552, 1.0
    %v554 = vrsqrt.pop %v553
    %v555 = vmul.f32 %v553, %v554
    %vm556 = vcmp.eq.f32.partialorder %v553, inf
    %v557 = vsel %vm556, %v553, %v555
    %vm558 = vcmp.eq.f32.partialorder %v553, 0.0
    %v559 = vand.u32 %v553, 2147483648
    %v560 = vsel %vm558, %v559, %v557
    %v561 = vmul.f32 %v560, -0.0012624911
    %v562 = vadd.f32 %v561, 0.00667009
    %v563 = vmul.f32 %v562, %v560
    %v564 = vadd.f32 %v563, -0.017088126
    %v565 = vmul.f32 %v564, %v560
    %v566 = vadd.f32 %v565, 0.03089188
    %v567 = vmul.f32 %v566, %v560
    %v568 = vadd.f32 %v567, -0.050174303
    %v569 = vmul.f32 %v568, %v560
    %v570 = vadd.f32 %v569, 0.08897899
    %v571 = vmul.f32 %v570, %v560
    %v572 = vadd.f32 %v571, -0.2145988
    %v573 = vmul.f32 %v572, %v560
    %v574 = vadd.f32 %v573, 1.5707963
    %v575 = vsub.f32 1.0, %v560
    %v576 = vrsqrt.pop %v575
    %v577 = vmul.f32 %v575, %v576
    %vm578 = vcmp.eq.f32.partialorder %v575, inf
    %v579 = vsel %vm578, %v575, %v577
    %vm580 = vcmp.eq.f32.partialorder %v575, 0.0
    %v581 = vand.u32 %v575, 2147483648
    %v582 = vsel %vm580, %v581, %v579
    %v583 = vmul.f32 %v582, %v574
    %v584 = vsub.f32 1.5707964, %v583
    %v585 = vmul.f32 %v584, 1.2732395
    %v586 = vsub.f32 %v585, 0.5
    %587 = vst [vmem:[#allocation7] sm:$0x3] %v586
    // Predicated region
    $region18: #{tpu_custom_call.1} parent=1 // pred_check
      _
    $region19: #{tpu_custom_call.1} parent=1 // pred_check_branch
      %589 = sbr.rel (0) target = $region21
    $region20: #{tpu_custom_call.1} parent=1 // pred_region
      %s591 = ssub.s32 32, 32
      %592 = vsyncadd [#allocation4], %s591
      %s594 = sshll.u32 [#allocation7], 4
      %s595 = int_to_ptr.vmem [resolvable:$true] %s594
      %597 = dma.vmem_to_hbm [thread:$0]  %s595, 32, %s2, [#allocation4]
    $region21: #{tpu_custom_call.1} parent=1 // pred_fallthru
      _
    // Predicated region
    $region22: #{tpu_custom_call.1} parent=1 // pred_check
      _
    $region23: #{tpu_custom_call.1} parent=1 // pred_check_branch
      %599 = sbr.rel (0) target = $region25
    $region24: #{tpu_custom_call.1} parent=1 // pred_region
      %600 = dma.done [#allocation4], 32
    $region25: #{tpu_custom_call.1} parent=1 // pred_fallthru
      _
    %601 = vsyncpa [#allocation3], 1
    %602 = vsyncpa [#allocation4], 1
    %603 = vsyncpa [#allocation5], 1

// kernel: tpu_custom_call.1
$region0: #{tpu_custom_call.1}
  #allocation0 [shape = 'u32[]', space=smem, size = 0x4, offset = 0x4, fixed_abs, tag = 'smem constant byte address 0x4 - core index']
  #allocation1 [shape = 'u32[144,128]{1,0:T(1,128)}', space=vmem, size = 0x12000, scoped, tag = 'internal scratch']
  %s0 = inlined_call_operand.hbm [shape: f32[4,512], index: 0, kind: input, shape index: {}]
  %s1 = inlined_call_operand.vmem [shape: f32[20], index: 1, kind: input, shape index: {}]
  %s2 = inlined_call_operand.hbm [shape: f32[2,512], index: 2, kind: output, shape index: {}]
  %s3 = sld [smem:[#allocation0]]
  $region49: #{tpu_custom_call.1} parent=0
    _
  %s5 = ssub.s32 1, %s3
  %s6 = scalar_select 0, %s5, %s3
  $region1: #{tpu_custom_call.1} parent=0
    #allocation2 [shape = 'u8[8192]{0}', space=vmem, size = 0x2000, scoped, tag = 'input window, operand 0']
    #allocation3 [shape = 's32[2]{0}', space=sflag, size = 0x8, scoped, tag = 'scoped memory for tpu_custom_call.1']
    #allocation4 [shape = 's32[2]{0}', space=sflag, size = 0x8, scoped, tag = 'scoped memory for tpu_custom_call.1']
    #allocation5 [shape = 's32[2]{0}', space=sflag, size = 0x8, scoped, tag = 'scoped memory for tpu_custom_call.1']
    #allocation6 [shape = 'u8[512]{0}', space=smem, size = 0x200, scoped, tag = 'input window, operand 1, single buffered']
    #allocation7 [shape = 'u8[4096]{0}', space=vmem, size = 0x1000, scoped, tag = 'output window, operand 0']
    %7 = vsyncpa [#allocation3], 0
    %s8 = scalar_lea.sflag [#allocation3], 1
    %9 = vsyncpa %s8, 0
    %10 = vsyncpa [#allocation5], 0
    %11 = vsyncpa [#allocation4], 0
    %s12 = scalar_lea.sflag [#allocation4], 1
    %13 = vsyncpa %s12, 0
    loop: start=0, step=1, limit=4
    $region2: #{tpu_custom_call.1} parent=1 // loop_pre_header
      _
    $region3: #{tpu_custom_call.1} parent=1 // loop_header
      %s15 = sphi 0, %s19
      %p16 = scmp.ge.s32.totalorder %s15, 4
      %s25 = sphi 0, %s27
      %s28 = sphi 0, %s25
      %s29 = sphi 0, %s28
      %s45 = sphi 0, %s29
      %s49 = sphi 0, %s49
      %s51 = sphi 0, %s49
      %s52 = sphi 0, %s51
      %s66 = sphi 0, %s52
      %s72 = sphi 0, %s74
      %s75 = sphi 0, %s72
      %s76 = sphi 0, %s75
      %s92 = sphi 0, %s76
    $region4: #{tpu_custom_call.1} parent=1 // loop_header_branch
      %18 = sbr.rel (%p16) target = $region8
    $region5: #{tpu_custom_call.1} parent=1 // loop_body
      %s20 = ssub.s32 %s15, 1
      %s21 = ssub.s32 %s15, 2
      %s22 = sadd.s32 %s15, 1
      %s23 = ssub.s32 %s15, %s22
      %p24 = scmp.eq.s32.totalorder %s23, 0
      %s26 = sadd.s32 %s25, 1
      %s27 = scalar_select %p24, %s25, %s26
      %p30 = pneg %p24
      %p31 = scmp.eq.s32.totalorder %s15, 1
      %p32 = por %p30, %p31
      %p33 = scmp.ne.s32.totalorder %s25, %s28
      %p34 = scmp.eq.s32.totalorder %s15, 0
      %p35 = por %p33, %p34
      %p36 = scmp.ne.s32.totalorder %s25, %s28
      %p37 = scmp.eq.s32.totalorder %s20, 1
      %p38 = por %p36, %p37
      %p39 = scmp.ne.s32.totalorder %s28, %s29
      %p40 = scmp.eq.s32.totalorder %s20, 0
      %p41 = por %p39, %p40
      %p42 = scmp.ne.s32.totalorder %s28, %s29
      %p43 = scmp.eq.s32.totalorder %s21, 1
      %p44 = por %p42, %p43
      %p46 = scmp.ne.s32.totalorder %s29, %s45
      %p47 = scmp.eq.s32.totalorder %s21, 0
      %p48 = por %p46, %p47
      %s50 = sadd.s32 %s49, 1
      %p53 = scmp.eq.s32.totalorder %s15, 1
      %p54 = scmp.ne.s32.totalorder %s49, %s51
      %p55 = scmp.eq.s32.totalorder %s15, 0
      %p56 = por %p54, %p55
      %p57 = scmp.ne.s32.totalorder %s49, %s51
      %p58 = scmp.eq.s32.totalorder %s20, 1
      %p59 = por %p57, %p58
      %p60 = scmp.ne.s32.totalorder %s51, %s52
      %p61 = scmp.eq.s32.totalorder %s20, 0
      %p62 = por %p60, %p61
      %p63 = scmp.ne.s32.totalorder %s51, %s52
      %p64 = scmp.eq.s32.totalorder %s21, 1
      %p65 = por %p63, %p64
      %p67 = scmp.ne.s32.totalorder %s52, %s66
      %p68 = scmp.eq.s32.totalorder %s21, 0
      %p69 = por %p67, %p68
      %s70 = ssub.s32 %s15, %s22
      %p71 = scmp.eq.s32.totalorder %s70, 0
      %s73 = sadd.s32 %s72, 1
      %s74 = scalar_select %p71, %s72, %s73
      %p77 = pneg %p71
      %p78 = scmp.eq.s32.totalorder %s15, 1
      %p79 = por %p77, %p78
      %p80 = scmp.ne.s32.totalorder %s72, %s75
      %p81 = scmp.eq.s32.totalorder %s15, 0
      %p82 = por %p80, %p81
      %p83 = scmp.ne.s32.totalorder %s72, %s75
      %p84 = scmp.eq.s32.totalorder %s20, 1
      %p85 = por %p83, %p84
      %p86 = scmp.ne.s32.totalorder %s75, %s76
      %p87 = scmp.eq.s32.totalorder %s20, 0
      %p88 = por %p86, %p87
      %p89 = scmp.ne.s32.totalorder %s75, %s76
      %p90 = scmp.eq.s32.totalorder %s21, 1
      %p91 = por %p89, %p90
      %p93 = scmp.ne.s32.totalorder %s76, %s92
      %p94 = scmp.eq.s32.totalorder %s21, 0
      %p95 = por %p93, %p94
      %p96 = scmp.le.s32.totalorder 1, %s15
      %p97 = scmp.lt.s32.totalorder %s15, 3
      %p98 = pnand %p96, %p97
      %p99 = pneg %p98
      // Predicated region
      $region9: #{tpu_custom_call.1} parent=5 // pred_check
        _
      $region10: #{tpu_custom_call.1} parent=5 // pred_check_branch
        %101 = sbr.rel (%p98) target = $region12
      $region11: #{tpu_custom_call.1} parent=5 // pred_region
        %s102 = ssub.s32 %s15, 1
        // Predicated region
        $region13: #{tpu_custom_call.1} parent=11 // pred_check
          %p103 = pneg %p62
        $region14: #{tpu_custom_call.1} parent=11 // pred_check_branch
          %105 = sbr.rel (%p103) target = $region16
        $region15: #{tpu_custom_call.1} parent=11 // pred_region
          %s107 = ssub.s32 16, 16
          %108 = vsyncadd [#allocation5], %s107
          %s110 = sshll.u32 %s1, 4
          %s111 = int_to_ptr.vmem [resolvable:$true] %s110
          %113 = dma.vmem_to_smem %s111, 16, [#allocation6], [#allocation5]
        $region16: #{tpu_custom_call.1} parent=11 // pred_fallthru
          _
      $region12: #{tpu_custom_call.1} parent=5 // pred_fallthru
        _
      %p114 = scmp.lt.s32.totalorder %s15, 2
      // Predicated region
      $region17: #{tpu_custom_call.1} parent=5 // pred_check
        %p115 = pneg %p114
      $region18: #{tpu_custom_call.1} parent=5 // pred_check_branch
        %117 = sbr.rel (%p115) target = $region20
      $region19: #{tpu_custom_call.1} parent=5 // pred_region
        // Predicated region
        $region21: #{tpu_custom_call.1} parent=19 // pred_check
          %p118 = pneg %p35
        $region22: #{tpu_custom_call.1} parent=19 // pred_check_branch
          %120 = sbr.rel (%p118) target = $region24
        $region23: #{tpu_custom_call.1} parent=19 // pred_region
          %s121 = sand.u32 %s25, 1
          %s122 = scalar_lea.sflag [#allocation3], %s121
          %s123 = sand.u32 %s25, 1
          %s124 = smul.addr %s123, 8
          %s125 = scalar_lea.vmem [#allocation2], %s124
          %s126 = smul.u32 2, %s15
          %s128 = ssub.s32 128, 128
          %129 = vsyncadd %s122, %s128
          %s130 = smul.addr %s126, 64
          %s131 = scalar_lea.hbm %s0, %s130
          %s133 = sshll.u32 %s125, 4
          %s134 = int_to_ptr.vmem [resolvable:$true] %s133
          %136 = dma.hbm_to_vmem [thread:$0]  %s131, 128, %s134, %s122
        $region24: #{tpu_custom_call.1} parent=19 // pred_fallthru
          _
      $region20: #{tpu_custom_call.1} parent=5 // pred_fallthru
        _
      %p137 = scmp.le.s32.totalorder 1, %s15
      %p138 = scmp.lt.s32.totalorder %s15, 3
      %p139 = pnand %p137, %p138
      %p140 = pneg %p139
      // Predicated region
      $region25: #{tpu_custom_call.1} parent=5 // pred_check
        _
      $region26: #{tpu_custom_call.1} parent=5 // pred_check_branch
        %142 = sbr.rel (%p139) target = $region28
      $region27: #{tpu_custom_call.1} parent=5 // pred_region
        %s143 = ssub.s32 %s15, 1
        %s144 = sand.u32 %s28, 1
        %s145 = scalar_lea.sflag [#allocation3], %s144
        %s146 = sand.u32 %s28, 1
        %s147 = smul.addr %s146, 8
        %s148 = scalar_lea.vmem [#allocation2], %s147
        // Predicated region
        $region29: #{tpu_custom_call.1} parent=27 // pred_check
          %p149 = pneg %p41
        $region30: #{tpu_custom_call.1} parent=27 // pred_check_branch
          %151 = sbr.rel (%p149) target = $region32
        $region31: #{tpu_custom_call.1} parent=27 // pred_region
          %152 = dma.done %s145, 128
        $region32: #{tpu_custom_call.1} parent=27 // pred_fallthru
          _
        // Predicated region
        $region33: #{tpu_custom_call.1} parent=27 // pred_check
          %p153 = pneg %p62
        $region34: #{tpu_custom_call.1} parent=27 // pred_check_branch
          %155 = sbr.rel (%p153) target = $region36
        $region35: #{tpu_custom_call.1} parent=27 // pred_region
          %156 = dma.done [#allocation5], 16
        $region36: #{tpu_custom_call.1} parent=27 // pred_fallthru
          _
        %157 = sfence
        %s158 = sand.u32 %s28, 1
        %s159 = scalar_lea.sflag [#allocation3], %s158
        %s160 = sand.u32 %s28, 1
        %s161 = smul.addr %s160, 8
        %s162 = scalar_lea.vmem [#allocation2], %s161
        %p163 = pneg %p41
        %p164 = pneg %p38
        %p165 = pneg %p62
        %p166 = pneg %p59
        %p167 = pneg %p88
        %p168 = pneg %p85
        %s169 = sand.u32 %s75, 1
        %s170 = scalar_lea.sflag [#allocation4], %s169
        %s171 = sand.u32 %s75, 1
        %s172 = smul.addr %s171, 4
        %s173 = scalar_lea.vmem [#allocation7], %s172
        %s174 = smul.u32 2, %s20
        %s175 = smul.u32 2, %s20
        %v176 = vld [vmem:[%s148] ss:$4 sm:$0x3]
        %s177 = scalar_lea.vmem %s148, 1 [#allocation2]
        %v178 = vld [vmem:[%s177] ss:$4 sm:$0x3]
        %s179 = scalar_lea.vmem %s148, 2 [#allocation2]
        %v180 = vld [vmem:[%s179] ss:$4 sm:$0x3]
        %s181 = scalar_lea.vmem %s148, 3 [#allocation2]
        %v182 = vld [vmem:[%s181] ss:$4 sm:$0x3]
        %v183 = vmul.f32 %v176, %v178
        %v184 = vmul.f32 %v176, %v182
        %v185 = vmul.f32 %v180, %v178
        %v186 = vmul.f32 %v180, %v182
        %v187 = vmul.f32 %v183, %v183
        %v188 = vmul.f32 %v183, %v184
        %v189 = vmul.f32 %v183, %v185
        %v190 = vmul.f32 %v183, %v186
        %v191 = vmul.f32 %v184, %v184
        %v192 = vmul.f32 %v184, %v185
        %v193 = vmul.f32 %v184, %v186
        %v194 = vmul.f32 %v185, %v185
        %v195 = vmul.f32 %v185, %v186
        %v196 = vmul.f32 %v186, %v186
        %s197 = sld [smem:[#allocation6]]
        %v198 = vstv %s197
        %v199 = vmul.f32 %v198, %v187
        %s200 = sld [smem:[#allocation6 + $0x1]]
        %v201 = vstv %s200
        %v202 = vmul.f32 %v201, %v188
        %v203 = vadd.f32 %v199, %v202
        %s204 = sld [smem:[#allocation6 + $0x2]]
        %v205 = vstv %s204
        %v206 = vmul.f32 %v205, %v189
        %v207 = vadd.f32 %v203, %v206
        %s208 = sld [smem:[#allocation6 + $0x3]]
        %v209 = vstv %s208
        %v210 = vmul.f32 %v209, %v190
        %v211 = vadd.f32 %v207, %v210
        %s212 = sld [smem:[#allocation6 + $0x4]]
        %v213 = vstv %s212
        %v214 = vmul.f32 %v213, %v191
        %v215 = vadd.f32 %v211, %v214
        %s216 = sld [smem:[#allocation6 + $0x5]]
        %v217 = vstv %s216
        %v218 = vmul.f32 %v217, %v192
        %v219 = vadd.f32 %v215, %v218
        %s220 = sld [smem:[#allocation6 + $0x6]]
        %v221 = vstv %s220
        %v222 = vmul.f32 %v221, %v193
        %v223 = vadd.f32 %v219, %v222
        %s224 = sld [smem:[#allocation6 + $0x7]]
        %v225 = vstv %s224
        %v226 = vmul.f32 %v225, %v194
        %v227 = vadd.f32 %v223, %v226
        %s228 = sld [smem:[#allocation6 + $0x8]]
        %v229 = vstv %s228
        %v230 = vmul.f32 %v229, %v195
        %v231 = vadd.f32 %v227, %v230
        %s232 = sld [smem:[#allocation6 + $0x9]]
        %v233 = vstv %s232
        %v234 = vmul.f32 %v233, %v196
        %v235 = vadd.f32 %v231, %v234
        %s236 = sld [smem:[#allocation6 + $0xa]]
        %v237 = vstv %s236
        %v238 = vmul.f32 %v237, %v187
        %s239 = sld [smem:[#allocation6 + $0xb]]
        %v240 = vstv %s239
        %v241 = vmul.f32 %v240, %v188
        %v242 = vadd.f32 %v238, %v241
        %s243 = sld [smem:[#allocation6 + $0xc]]
        %v244 = vstv %s243
        %v245 = vmul.f32 %v244, %v189
        %v246 = vadd.f32 %v242, %v245
        %s247 = sld [smem:[#allocation6 + $0xd]]
        %v248 = vstv %s247
        %v249 = vmul.f32 %v248, %v190
        %v250 = vadd.f32 %v246, %v249
        %s251 = sld [smem:[#allocation6 + $0xe]]
        %v252 = vstv %s251
        %v253 = vmul.f32 %v252, %v191
        %v254 = vadd.f32 %v250, %v253
        %s255 = sld [smem:[#allocation6 + $0xf]]
        %v256 = vstv %s255
        %v257 = vmul.f32 %v256, %v192
        %v258 = vadd.f32 %v254, %v257
        %s259 = sld [smem:[#allocation6 + $0x10]]
        %v260 = vstv %s259
        %v261 = vmul.f32 %v260, %v193
        %v262 = vadd.f32 %v258, %v261
        %s263 = sld [smem:[#allocation6 + $0x11]]
        %v264 = vstv %s263
        %v265 = vmul.f32 %v264, %v194
        %v266 = vadd.f32 %v262, %v265
        %s267 = sld [smem:[#allocation6 + $0x12]]
        %v268 = vstv %s267
        %v269 = vmul.f32 %v268, %v195
        %v270 = vadd.f32 %v266, %v269
        %s271 = sld [smem:[#allocation6 + $0x13]]
        %v272 = vstv %s271
        %v273 = vmul.f32 %v272, %v196
        %v274 = vadd.f32 %v270, %v273
        %v276 = vlaneseq
        %v277 = vshrl.u32 %v276, 7
        %v278 = vsub.s32 0, %v277
        %v279 = vrot.slane %v235, %v278
        %v280 = vlaneseq
        %v281 = vshrl.u32 %v280, 7
        %v282 = vsub.s32 1, %v281
        %v283 = vrot.slane %v235, %v282
        %v287 = vlaneseq
        %v288 = vshrl.u32 %v287, 7
        %v289 = vsub.s32 0, %v288
        %v290 = vrot.slane %v274, %v289
        %v291 = vlaneseq
        %v292 = vshrl.u32 %v291, 7
        %v293 = vsub.s32 1, %v292
        %v294 = vrot.slane %v274, %v293
        %vm297 = vcmask 1040384
        %v298 = vsel %vm297, %v279, %v290
        %v299 = vsel %vm297, %v283, %v294
        %v300 = vmax.f32 %v298, 0.0
        %v301 = vmax.f32 %v299, 0.0
        %v302 = vmin.f32 %v300, 1.0
        %v303 = vmin.f32 %v301, 1.0
        %v304 = vrsqrt.pop %v302
        %v305 = vmul.f32 %v302, %v304
        %vm306 = vcmp.eq.f32.partialorder %v302, inf
        %v307 = vsel %vm306, %v302, %v305
        %vm308 = vcmp.eq.f32.partialorder %v302, 0.0
        %v309 = vand.u32 %v302, 2147483648
        %v310 = vsel %vm308, %v309, %v307
        %v311 = vrsqrt.pop %v303
        %v312 = vmul.f32 %v303, %v311
        %vm313 = vcmp.eq.f32.partialorder %v303, inf
        %v314 = vsel %vm313, %v303, %v312
        %vm315 = vcmp.eq.f32.partialorder %v303, 0.0
        %v316 = vand.u32 %v303, 2147483648
        %v317 = vsel %vm315, %v316, %v314
        %v318 = vmul.f32 %v310, -0.0012624911
        %v319 = vmul.f32 %v317, -0.0012624911
        %v320 = vadd.f32 %v318, 0.00667009
        %v321 = vadd.f32 %v319, 0.00667009
        %v322 = vmul.f32 %v320, %v310
        %v323 = vmul.f32 %v321, %v317
        %v324 = vadd.f32 %v322, -0.017088126
        %v325 = vadd.f32 %v323, -0.017088126
        %v326 = vmul.f32 %v324, %v310
        %v327 = vmul.f32 %v325, %v317
        %v328 = vadd.f32 %v326, 0.03089188
        %v329 = vadd.f32 %v327, 0.03089188
        %v330 = vmul.f32 %v328, %v310
        %v331 = vmul.f32 %v329, %v317
        %v332 = vadd.f32 %v330, -0.050174303
        %v333 = vadd.f32 %v331, -0.050174303
        %v334 = vmul.f32 %v332, %v310
        %v335 = vmul.f32 %v333, %v317
        %v336 = vadd.f32 %v334, 0.08897899
        %v337 = vadd.f32 %v335, 0.08897899
        %v338 = vmul.f32 %v336, %v310
        %v339 = vmul.f32 %v337, %v317
        %v340 = vadd.f32 %v338, -0.2145988
        %v341 = vadd.f32 %v339, -0.2145988
        %v342 = vmul.f32 %v340, %v310
        %v343 = vmul.f32 %v341, %v317
        %v344 = vadd.f32 %v342, 1.5707963
        %v345 = vadd.f32 %v343, 1.5707963
        %v346 = vsub.f32 1.0, %v310
        %v347 = vsub.f32 1.0, %v317
        %v348 = vrsqrt.pop %v346
        %v349 = vmul.f32 %v346, %v348
        %vm350 = vcmp.eq.f32.partialorder %v346, inf
        %v351 = vsel %vm350, %v346, %v349
        %vm352 = vcmp.eq.f32.partialorder %v346, 0.0
        %v353 = vand.u32 %v346, 2147483648
        %v354 = vsel %vm352, %v353, %v351
        %v355 = vrsqrt.pop %v347
        %v356 = vmul.f32 %v347, %v355
        %vm357 = vcmp.eq.f32.partialorder %v347, inf
        %v358 = vsel %vm357, %v347, %v356
        %vm359 = vcmp.eq.f32.partialorder %v347, 0.0
        %v360 = vand.u32 %v347, 2147483648
        %v361 = vsel %vm359, %v360, %v358
        %v362 = vmul.f32 %v354, %v344
        %v363 = vmul.f32 %v361, %v345
        %v364 = vsub.f32 1.5707964, %v362
        %v365 = vsub.f32 1.5707964, %v363
        %v366 = vmul.f32 %v364, 1.2732395
        %v367 = vmul.f32 %v365, 1.2732395
        %v368 = vsub.f32 %v366, 0.5
        %v369 = vsub.f32 %v367, 0.5
        %v372 = vcombine.low %v368, %v369
        %v374 = vunpack.c.l.s4 1983009808
        %v375 = vunpack.c.0.s8 %v374
        %v376 = vlaneseq
        %v377 = vshrl.u32 %v376, 7
        %v378 = vsub.s32 %v375, %v377
        %v379 = vrot.slane %v372, %v378
        %381 = vst [vmem:[%s173] sm:$0xf] %v379
        %s382 = sand.u32 %s75, 1
        %s383 = scalar_lea.sflag [#allocation4], %s382
        %s384 = sand.u32 %s75, 1
        %s385 = smul.addr %s384, 4
        %s386 = scalar_lea.vmem [#allocation7], %s385
        // Predicated region
        $region37: #{tpu_custom_call.1} parent=27 // pred_check
          %p387 = pneg %p85
        $region38: #{tpu_custom_call.1} parent=27 // pred_check_branch
          %389 = sbr.rel (%p387) target = $region40
        $region39: #{tpu_custom_call.1} parent=27 // pred_region
          %s390 = smul.u32 2, %s20
          %s392 = ssub.s32 64, 64
          %393 = vsyncadd %s383, %s392
          %s394 = smul.addr %s390, 32
          %s395 = scalar_lea.hbm %s2, %s394
          %s397 = sshll.u32 %s386, 4
          %s398 = int_to_ptr.vmem [resolvable:$true] %s397
          %400 = dma.vmem_to_hbm [thread:$0]  %s398, 64, %s395, %s383
        $region40: #{tpu_custom_call.1} parent=27 // pred_fallthru
          _
      $region28: #{tpu_custom_call.1} parent=5 // pred_fallthru
        _
      %p401 = scmp.le.s32.totalorder 2, %s15
      // Predicated region
      $region41: #{tpu_custom_call.1} parent=5 // pred_check
        %p402 = pneg %p401
      $region42: #{tpu_custom_call.1} parent=5 // pred_check_branch
        %404 = sbr.rel (%p402) target = $region44
      $region43: #{tpu_custom_call.1} parent=5 // pred_region
        %s405 = ssub.s32 %s15, 2
        // Predicated region
        $region45: #{tpu_custom_call.1} parent=43 // pred_check
          %p406 = pneg %p91
        $region46: #{tpu_custom_call.1} parent=43 // pred_check_branch
          %408 = sbr.rel (%p406) target = $region48
        $region47: #{tpu_custom_call.1} parent=43 // pred_region
          %s409 = sand.u32 %s76, 1
          %s410 = scalar_lea.sflag [#allocation4], %s409
          %s411 = sand.u32 %s76, 1
          %s412 = smul.addr %s411, 4
          %s413 = scalar_lea.vmem [#allocation7], %s412
          %414 = dma.done %s410, 64
        $region48: #{tpu_custom_call.1} parent=43 // pred_fallthru
          _
      $region44: #{tpu_custom_call.1} parent=5 // pred_fallthru
        _
    $region6: #{tpu_custom_call.1} parent=1 // loop_footer
      %s19 = sadd.s32 1, %s15
    $region7: #{tpu_custom_call.1} parent=1 // loop_footer_branch
      %14 = sbr.rel target = $region3
    $region8: #{tpu_custom_call.1} parent=1 // loop_exit
      _
    %415 = vsyncpa [#allocation3], 1
    %s416 = scalar_lea.sflag [#allocation3], 1
    %417 = vsyncpa %s416, 1
    %418 = vsyncpa [#allocation4], 1
    %s419 = scalar_lea.sflag [#allocation4], 1
    %420 = vsyncpa %s419, 1
    %421 = vsyncpa [#allocation5], 1
    %s422 = scalar_lea.sflag [#allocation5], 1
    %423 = vsyncpa %s422, 1

</llo_original>
